<compile_context>
chip_gen: v7x
topology: tpu7x:2x2x1
jax: 0.10.0
libtpu: 0.0.40
codegen_flags: <defaults>
</compile_context>

<pallas_src>
import functools

import jax
import jax.numpy as jnp
from jax.experimental import pallas as pl
from jax.experimental.pallas import tpu as pltpu

BN_EPS = 1e-5
_PAD_NEG = -1e30  # sentinel padding for conv2 input: ReLU((pad - mean)*inv) == 0


# ---------------------------------------------------------------------------
# Kernel 1: Conv1 (+bias) on a halo'd row tile + per-tile BN partial stats.
#   x_ref:     (TH+2, W+2, C)   bf16 zero-padded input tile (1-row halo)
#   w_ref:     (9*C, C2)        bf16 conv1 weights, taps folded into K
#   b_ref:     (1, C2)          f32 conv1 bias
#   h_ref:     (TH, W, C2)      f32 conv1 output tile
#   stats_ref: (2, C2)          f32 [per-tile sum; per-tile sum of squares]
# ---------------------------------------------------------------------------
def _conv1_stats_kernel(x_ref, w_ref, b_ref, h_ref, stats_ref):
    TH, W, C2 = h_ref.shape
    C = x_ref.shape[-1]
    xt = x_ref[...]  # bf16
    # 9 shifted taps of the halo'd tile, concatenated along channels -> K=9*C.
    taps = [xt[dy:dy + TH, dx:dx + W, :] for dy in range(3) for dx in range(3)]
    p = jnp.concatenate(taps, axis=-1).reshape(TH * W, 9 * C)  # bf16
    acc = jnp.dot(p, w_ref[...], preferred_element_type=jnp.float32)
    acc = acc + b_ref[...]  # (TH*W, C2) f32
    h_ref[...] = acc.reshape(TH, W, C2)
    s = jnp.sum(acc, axis=0, keepdims=True)            # (1, C2)
    ss = jnp.sum(acc * acc, axis=0, keepdims=True)      # (1, C2)
    stats_ref[...] = jnp.concatenate([s, ss], axis=0)   # (2, C2)


# ---------------------------------------------------------------------------
# Kernel 2: global BN normalize + ReLU + Conv2 (+bias) on a halo'd row tile.
#   stats_ref: (N, T, 2, C2) f32  per-tile partial stats (reduced in-kernel)
#   h_ref:     (TH+2, W+2, C2) f32 conv1 output tile, border padded with
#              _PAD_NEG so that normalize+ReLU maps padding exactly to 0
#              (valid because gamma = 1 > 0 at init).
#   w_ref:     (9*C2, Cout) bf16 ; b_ref: (1, Cout) f32
#   gamma_ref, beta_ref: (1, C2) f32 BN affine params (1 and 0 at init)
#   y_ref:     (TH, W, Cout) f32
# ---------------------------------------------------------------------------
def _bn_relu_conv2_kernel(stats_ref, h_ref, w_ref, b_ref, gamma_ref, beta_ref,
                          y_ref):
    TH, W, Cout = y_ref.shape
    C2 = h_ref.shape[-1]
    n_tiles = stats_ref.shape[0] * stats_ref.shape[1]
    count = jnp.float32(n_tiles * TH * W)  # == N*H*W

    tot = jnp.sum(stats_ref[...], axis=(0, 1))          # (2, C2)
    mean = tot[0:1, :] / count                           # (1, C2)
    var = tot[1:2, :] / count - mean * mean              # biased variance
    inv = jax.lax.rsqrt(var + BN_EPS)                    # (1, C2), f32
    scale = (gamma_ref[...] * inv).reshape(1, 1, C2)
    shift = (beta_ref[...] - mean * gamma_ref[...] * inv).reshape(1, 1, C2)

    a = jnp.maximum(h_ref[...] * scale + shift, 0.0)     # BN + ReLU, f32
    a = a.astype(jnp.bfloat16)
    taps = [a[dy:dy + TH, dx:dx + W, :] for dy in range(3) for dx in range(3)]
    p = jnp.concatenate(taps, axis=-1).reshape(TH * W, 9 * C2)
    acc = jnp.dot(p, w_ref[...], preferred_element_type=jnp.float32)
    acc = acc + b_ref[...]
    y_ref[...] = acc.reshape(TH, W, Cout)


# ---------------------------------------------------------------------------
# Kernel 3: bilinear upsample (align_corners=True) as two matmuls per plane.
#   x_ref:   (H, W)     f32 one (n, c) plane in NCHW layout
#   ah_ref:  (Ho, H)    f32 row interpolation matrix
#   awt_ref: (W, Wo)    f32 column interpolation matrix (transposed)
#   y_ref:   (Ho, Wo)   f32
# ---------------------------------------------------------------------------
def _upsample_kernel(x_ref, ah_ref, awt_ref, y_ref):
    t = jnp.dot(ah_ref[...], x_ref[...], preferred_element_type=jnp.float32)
    y_ref[...] = jnp.dot(t, awt_ref[...], preferred_element_type=jnp.float32)


# ---------------------------------------------------------------------------
# Wrapper glue
# ---------------------------------------------------------------------------
def _bilinear_matrix(in_size, out_size):
    """Dense (out, in) matrix implementing 1-D bilinear interp, align_corners."""
    if out_size == 1:
        pos = jnp.zeros((1,), jnp.float32)
    else:
        pos = jnp.arange(out_size, dtype=jnp.float32) * (
            (in_size - 1) / (out_size - 1))
    lo = jnp.floor(pos).astype(jnp.int32)
    hi = jnp.minimum(lo + 1, in_size - 1)
    frac = pos - lo.astype(jnp.float32)
    rows = jnp.arange(out_size)
    A = jnp.zeros((out_size, in_size), jnp.float32)
    A = A.at[rows, lo].add(1.0 - frac)
    A = A.at[rows, hi].add(frac)
    return A


def _pick_tile_rows(H, W, C, budget_bytes=2 * 1024 * 1024):
    """Largest divisor of H whose bf16 halo'd input tile stays under budget."""
    best = 1
    for th in range(1, H + 1):
        if H % th == 0 and (th + 2) * (W + 2) * C * 2 <= budget_bytes:
            best = th
    return best


def _row_halo_tiles(padded, tile_rows):
    """(N, Hp, Wp, C) zero/const-padded -> (N, T, TH+2, Wp, C) halo'd tiles."""
    N, Hp, Wp, C = padded.shape
    T = (Hp - 2) // tile_rows
    return jnp.stack(
        [padded[:, t * tile_rows:t * tile_rows + tile_rows + 2]
         for t in range(T)], axis=1)


def ao_forward(x_nchw, w1_oihw, b1, gamma, beta, w2_oihw, b2, *,
               upfactor=2, tile_rows=None):
    """AO.forward. x: (N,C,H,W) f32; weights in PyTorch (out,in,kh,kw) layout.

    Returns (N, Cout, H*upfactor, W*upfactor) f32 (NCHW, like PyTorch).
    """
    N, C, H, W = x_nchw.shape
    C2 = w1_oihw.shape[0]
    Cout = w2_oihw.shape[0]
    if tile_rows is None:
        tile_rows = _pick_tile_rows(H, W, C)
    TH = int(tile_rows)
    assert H % TH == 0, f"tile_rows={TH} must divide H={H}"
    T = H // TH
    Wp = W + 2

    # --- weight / bias repack (layout glue only) ---
    # (out,in,kh,kw) -> (kh,kw,in,out) -> (9*in, out); taps folded into K.
    w1_k = jnp.transpose(w1_oihw, (2, 3, 1, 0)).reshape(9 * C, C2)
    w1_k = w1_k.astype(jnp.bfloat16)
    w2_k = jnp.transpose(w2_oihw, (2, 3, 1, 0)).reshape(9 * C2, Cout)
    w2_k = w2_k.astype(jnp.bfloat16)
    b1_k = b1.reshape(1, C2).astype(jnp.float32)
    b2_k = b2.reshape(1, Cout).astype(jnp.float32)
    g_k = gamma.reshape(1, C2).astype(jnp.float32)
    be_k = beta.reshape(1, C2).astype(jnp.float32)

    x_nhwc = jnp.transpose(x_nchw, (0, 2, 3, 1)).astype(jnp.float32)

    cparams = pltpu.CompilerParams(
        dimension_semantics=("parallel", "parallel"),  # 2 TCs on v7x
        vmem_limit_bytes=32 * 1024 * 1024,             # tiles budgeted << this
    )

    # ---- pass 1: Conv1 + per-tile BN partial stats ----
    xpad = jnp.pad(x_nhwc, ((0, 0), (1, 1), (1, 1), (0, 0)))
    x_tiles = _row_halo_tiles(xpad, TH).astype(jnp.bfloat16)  # (N,T,TH+2,Wp,C)

    h1, stats = pl.pallas_call(
        _conv1_stats_kernel,
        grid=(N, T),
        in_specs=[
            pl.BlockSpec((None, None, TH + 2, Wp, C),
                         lambda n, t: (n, t, 0, 0, 0)),
            pl.BlockSpec((9 * C, C2), lambda n, t: (0, 0)),
            pl.BlockSpec((1, C2), lambda n, t: (0, 0)),
        ],
        out_specs=(
            pl.BlockSpec((None, TH, W, C2), lambda n, t: (n, t, 0, 0)),
            pl.BlockSpec((None, None, 2, C2), lambda n, t: (n, t, 0, 0)),
        ),
        out_shape=(
            jax.ShapeDtypeStruct((N, H, W, C2), jnp.float32),
            jax.ShapeDtypeStruct((N, T, 2, C2), jnp.float32),
        ),
        compiler_params=cparams,
    )(x_tiles, w1_k, b1_k)

    # ---- pass 2: global BN normalize + ReLU + Conv2 ----
    # Pad with a large negative sentinel: after (x-mean)*inv_std (+beta) and
    # ReLU the border becomes exactly 0, which is the correct conv2 padding.
    hpad = jnp.pad(h1, ((0, 0), (1, 1), (1, 1), (0, 0)),
                   constant_values=_PAD_NEG)
    h_tiles = _row_halo_tiles(hpad, TH)                     # (N,T,TH+2,Wp,C2) f32

    y2 = pl.pallas_call(
        _bn_relu_conv2_kernel,
        grid=(N, T),
        in_specs=[
            pl.BlockSpec((N, T, 2, C2), lambda n, t: (0, 0, 0, 0)),
            pl.BlockSpec((None, None, TH + 2, Wp, C2),
                         lambda n, t: (n, t, 0, 0, 0)),
            pl.BlockSpec((9 * C2, Cout), lambda n, t: (0, 0)),
            pl.BlockSpec((1, Cout), lambda n, t: (0, 0)),
            pl.BlockSpec((1, C2), lambda n, t: (0, 0)),
            pl.BlockSpec((1, C2), lambda n, t: (0, 0)),
        ],
        out_specs=pl.BlockSpec((None, TH, W, Cout), lambda n, t: (n, t, 0, 0)),
        out_shape=jax.ShapeDtypeStruct((N, H, W, Cout), jnp.float32),
        compiler_params=cparams,
    )(stats, h_tiles, w2_k, b2_k, g_k, be_k)

    # ---- pass 3: bilinear upsample (align_corners=True), NCHW output ----
    Ho, Wo = H * upfactor, W * upfactor
    A_h = _bilinear_matrix(H, Ho)          # (Ho, H)
    A_wT = _bilinear_matrix(W, Wo).T       # (W, Wo)
    y2_nchw = jnp.transpose(y2, (0, 3, 1, 2))  # layout glue: lane dim = W

    out = pl.pallas_call(
        _upsample_kernel,
        grid=(N, Cout),
        in_specs=[
            pl.BlockSpec((None, None, H, W), lambda n, c: (n, c, 0, 0)),
            pl.BlockSpec((Ho, H), lambda n, c: (0, 0)),
            pl.BlockSpec((W, Wo), lambda n, c: (0, 0)),
        ],
        out_specs=pl.BlockSpec((None, None, Ho, Wo), lambda n, c: (n, c, 0, 0)),
        out_shape=jax.ShapeDtypeStruct((N, Cout, Ho, Wo), jnp.float32),
        compiler_params=cparams,
    )(y2_nchw, A_h, A_wT)
    return out


# ---------------------------------------------------------------------------
# Pure-JAX reference (for correctness check only)
# ---------------------------------------------------------------------------
def _reference(x_nchw, w1_oihw, b1, gamma, beta, w2_oihw, b2, upfactor):
    dn = ("NHWC", "HWIO", "NHWC")
    x = jnp.transpose(x_nchw, (0, 2, 3, 1))
    h = jax.lax.conv_general_dilated(
        x, jnp.transpose(w1_oihw, (2, 3, 1, 0)), (1, 1), "SAME",
        dimension_numbers=dn) + b1
    mean = jnp.mean(h, axis=(0, 1, 2))
    var = jnp.mean((h - mean) ** 2, axis=(0, 1, 2))
    h = (h - mean) * jax.lax.rsqrt(var + BN_EPS) * gamma + beta
    h = jax.nn.relu(h)
    y = jax.lax.conv_general_dilated(
        h, jnp.transpose(w2_oihw, (2, 3, 1, 0)), (1, 1), "SAME",
        dimension_numbers=dn) + b2

    def lerp_axis(a, in_size, out_size, axis):
        pos = jnp.arange(out_size) * ((in_size - 1) / max(out_size - 1, 1))
        lo = jnp.floor(pos).astype(jnp.int32)
        hi = jnp.minimum(lo + 1, in_size - 1)
        w = (pos - lo).astype(a.dtype)
        shape = [1] * a.ndim
        shape[axis] = out_size
        w = w.reshape(shape)
        return jnp.take(a, lo, axis=axis) * (1 - w) + jnp.take(a, hi, axis=axis) * w

    N, H, W, C = y.shape
    y = lerp_axis(y, H, H * upfactor, axis=1)
    y = lerp_axis(y, W, W * upfactor, axis=2)
    return jnp.transpose(y, (0, 3, 1, 2))


if __name__ == "__main__":
    # AO(inchannels=8, outchannels=4, upfactor=2) on a small input.
    N, Cin, H, W = 2, 8, 16, 16
    Cout, upfactor = 4, 2
    C2 = Cin // 2

    key = jax.random.PRNGKey(0)
    kx, kw1, kw2 = jax.random.split(key, 3)

    x = jax.random.normal(kx, (N, Cin, H, W), jnp.float32)
    # init_params: conv weights ~ N(0, 0.01^2), conv biases 0, BN gamma=1 beta=0
    w1 = jax.random.normal(kw1, (C2, Cin, 3, 3), jnp.float32) * 0.01
    b1 = jnp.zeros((C2,), jnp.float32)
    gamma = jnp.ones((C2,), jnp.float32)
    beta = jnp.zeros((C2,), jnp.float32)
    w2 = jax.random.normal(kw2, (Cout, C2, 3, 3), jnp.float32) * 0.01
    b2 = jnp.zeros((Cout,), jnp.float32)

    fwd = jax.jit(functools.partial(ao_forward, upfactor=upfactor, tile_rows=8))
    out = jax.block_until_ready(fwd(x, w1, b1, gamma, beta, w2, b2))

    ref = _reference(x, w1, b1, gamma, beta, w2, b2, upfactor)
    assert out.shape == (N, Cout, H * upfactor, W * upfactor)
    max_err = float(jnp.max(jnp.abs(out - ref)))
    # bf16 MXU inputs with f32 accumulation / f32 BN stats -> ~1e-3 worst case.
    assert jnp.allclose(out, ref, atol=3e-3, rtol=1e-2), max_err
    print("KERNEL_OK")
</pallas_src>

<mosaic_0001>
module attributes {stable_mosaic.version = 11 : i64} {
  func.func private @main(%arg0: i32) attributes {dimension_semantics = [#tpu.dimension_semantics<core_parallel>], iteration_bounds = array<i64: 2>, tpu.core_type = #tpu.core_type<sc_scalar_subcore>, window_params = []} {
    return
  }
}

module attributes {stable_mosaic.version = 11 : i64} {
  func.func private @main(%arg0: i32) attributes {dimension_semantics = [#tpu.dimension_semantics<core_parallel>], iteration_bounds = array<i64: 2>, tpu.core_type = #tpu.core_type<sc_scalar_subcore>, window_params = []} {
    return
  }
}

module attributes {stable_mosaic.version = 11 : i64} {
  func.func @_conv1_stats_kernel(%arg0: i32, %arg1: i32, %arg2: memref<1x1x10x18x8xbf16, #tpu.memory_space<vmem>>, %arg3: memref<72x4xbf16, #tpu.memory_space<vmem>>, %arg4: memref<1x4xf32, #tpu.memory_space<vmem>>, %arg5: memref<1x8x16x4xf32, #tpu.memory_space<vmem>>, %arg6: memref<1x1x2x4xf32, #tpu.memory_space<vmem>>) attributes {dimension_semantics = [#tpu.dimension_semantics<parallel>, #tpu.dimension_semantics<parallel>], iteration_bounds = array<i64: 2, 2>, scalar_prefetch = 0 : i64, scratch_operands = 0 : i64, tpu.core_type = #tpu.core_type<tc>, window_params = [{transform_indices = @transform_0, window_bounds = array<i64: 1, 1, 10, 18, 8>}, {pipeline_mode = #tpu.pipeline_mode<synchronous>, transform_indices = @transform_1, window_bounds = array<i64: 72, 4>}, {pipeline_mode = #tpu.pipeline_mode<synchronous>, transform_indices = @transform_2, window_bounds = array<i64: 1, 4>}, {transform_indices = @transform_3, window_bounds = array<i64: 1, 8, 16, 4>}, {transform_indices = @transform_4, window_bounds = array<i64: 1, 1, 2, 4>}]} {
    %c0 = arith.constant 0 : index
    %c0_0 = arith.constant 0 : index
    %c0_1 = arith.constant 0 : index
    %c0_2 = arith.constant 0 : index
    %c0_3 = arith.constant 0 : index
    %0 = vector.load %arg2[%c0, %c0_0, %c0_1, %c0_2, %c0_3] : memref<1x1x10x18x8xbf16, #tpu.memory_space<vmem>>, vector<1x1x10x18x8xbf16>
    %1 = vector.shape_cast %0 : vector<1x1x10x18x8xbf16> to vector<10x18x8xbf16>
    %2 = vector.extract_strided_slice %1 {offsets = [0, 0, 0], sizes = [8, 16, 8], strides = [1, 1, 1]} : vector<10x18x8xbf16> to vector<8x16x8xbf16>
    %3 = vector.extract_strided_slice %1 {offsets = [0, 1, 0], sizes = [8, 16, 8], strides = [1, 1, 1]} : vector<10x18x8xbf16> to vector<8x16x8xbf16>
    %4 = vector.extract_strided_slice %1 {offsets = [0, 2, 0], sizes = [8, 16, 8], strides = [1, 1, 1]} : vector<10x18x8xbf16> to vector<8x16x8xbf16>
    %5 = vector.extract_strided_slice %1 {offsets = [1, 0, 0], sizes = [8, 16, 8], strides = [1, 1, 1]} : vector<10x18x8xbf16> to vector<8x16x8xbf16>
    %6 = vector.extract_strided_slice %1 {offsets = [1, 1, 0], sizes = [8, 16, 8], strides = [1, 1, 1]} : vector<10x18x8xbf16> to vector<8x16x8xbf16>
    %7 = vector.extract_strided_slice %1 {offsets = [1, 2, 0], sizes = [8, 16, 8], strides = [1, 1, 1]} : vector<10x18x8xbf16> to vector<8x16x8xbf16>
    %8 = vector.extract_strided_slice %1 {offsets = [2, 0, 0], sizes = [8, 16, 8], strides = [1, 1, 1]} : vector<10x18x8xbf16> to vector<8x16x8xbf16>
    %9 = vector.extract_strided_slice %1 {offsets = [2, 1, 0], sizes = [8, 16, 8], strides = [1, 1, 1]} : vector<10x18x8xbf16> to vector<8x16x8xbf16>
    %10 = vector.extract_strided_slice %1 {offsets = [2, 2, 0], sizes = [8, 16, 8], strides = [1, 1, 1]} : vector<10x18x8xbf16> to vector<8x16x8xbf16>
    %11 = tpu.concatenate %2, %3, %4, %5, %6, %7, %8, %9, %10 in 2 : vector<8x16x8xbf16>, vector<8x16x8xbf16>, vector<8x16x8xbf16>, vector<8x16x8xbf16>, vector<8x16x8xbf16>, vector<8x16x8xbf16>, vector<8x16x8xbf16>, vector<8x16x8xbf16>, vector<8x16x8xbf16> -> vector<8x16x72xbf16>
    %12 = vector.shape_cast %11 : vector<8x16x72xbf16> to vector<128x72xbf16>
    %c0_4 = arith.constant 0 : index
    %c0_5 = arith.constant 0 : index
    %13 = vector.load %arg3[%c0_4, %c0_5] : memref<72x4xbf16, #tpu.memory_space<vmem>>, vector<72x4xbf16>
    %cst = arith.constant dense<0.000000e+00> : vector<128x4xf32>
    %14 = tpu.matmul %12, %13, %cst {dimension_numbers = #tpu.dot_dimension_numbers<[1], [0], [0], [1], [0, 0, 1, 1], [], []>} : vector<128x72xbf16>, vector<72x4xbf16>, vector<128x4xf32> -> vector<128x4xf32>
    %c0_6 = arith.constant 0 : index
    %c0_7 = arith.constant 0 : index
    %15 = vector.load %arg4[%c0_6, %c0_7] : memref<1x4xf32, #tpu.memory_space<vmem>>, vector<1x4xf32>
    %16 = vector.broadcast %15 : vector<1x4xf32> to vector<128x4xf32>
    %17 = arith.addf %14, %16 : vector<128x4xf32>
    %18 = vector.shape_cast %17 : vector<128x4xf32> to vector<8x16x4xf32>
    %c0_8 = arith.constant 0 : index
    %c0_9 = arith.constant 0 : index
    %c0_10 = arith.constant 0 : index
    %c0_11 = arith.constant 0 : index
    %19 = vector.load %arg5[%c0_8, %c0_9, %c0_10, %c0_11] : memref<1x8x16x4xf32, #tpu.memory_space<vmem>>, vector<1x8x16x4xf32>
    %20 = vector.shape_cast %19 : vector<1x8x16x4xf32> to vector<8x16x4xf32>
    %21 = vector.shape_cast %18 : vector<8x16x4xf32> to vector<1x8x16x4xf32>
    tpu.vector_store %arg5[%c0_8, %c0_9, %c0_10, %c0_11], %21 {strides = array<i32>} : memref<1x8x16x4xf32, #tpu.memory_space<vmem>>, vector<1x8x16x4xf32>,
    %cst_12 = arith.constant dense<0.000000e+00> : vector<4xf32>
    %22 = vector.multi_reduction <add>, %17, %cst_12 [0] : vector<128x4xf32> to vector<4xf32>
    %23 = vector.shape_cast %22 : vector<4xf32> to vector<1x4xf32>
    %24 = arith.mulf %17, %17 : vector<128x4xf32>
    %cst_13 = arith.constant dense<0.000000e+00> : vector<4xf32>
    %25 = vector.multi_reduction <add>, %24, %cst_13 [0] : vector<128x4xf32> to vector<4xf32>
    %26 = vector.shape_cast %25 : vector<4xf32> to vector<1x4xf32>
    %27 = tpu.concatenate %23, %26 in 0 : vector<1x4xf32>, vector<1x4xf32> -> vector<2x4xf32>
    %c0_14 = arith.constant 0 : index
    %c0_15 = arith.constant 0 : index
    %c0_16 = arith.constant 0 : index
    %c0_17 = arith.constant 0 : index
    %28 = vector.load %arg6[%c0_14, %c0_15, %c0_16, %c0_17] : memref<1x1x2x4xf32, #tpu.memory_space<vmem>>, vector<1x1x2x4xf32>
    %29 = vector.shape_cast %28 : vector<1x1x2x4xf32> to vector<2x4xf32>
    %30 = vector.shape_cast %27 : vector<2x4xf32> to vector<1x1x2x4xf32>
    tpu.vector_store %arg6[%c0_14, %c0_15, %c0_16, %c0_17], %30 {strides = array<i32>} : memref<1x1x2x4xf32, #tpu.memory_space<vmem>>, vector<1x1x2x4xf32>,
    return
  }
  func.func @transform_0(%arg0: i32, %arg1: i32) -> (i32, i32, i32, i32, i32) {
    %c0_i32 = arith.constant 0 : i32
    %c0_i32_0 = arith.constant 0 : i32
    %c0_i32_1 = arith.constant 0 : i32
    %c0_i32_2 = arith.constant 0 : i32
    return %arg0, %arg1, %c0_i32, %c0_i32_0, %c0_i32_1 : i32, i32, i32, i32, i32
  }
  func.func @transform_1(%arg0: i32, %arg1: i32) -> (i32, i32) {
    %c0_i32 = arith.constant 0 : i32
    %c0_i32_0 = arith.constant 0 : i32
    %c0_i32_1 = arith.constant 0 : i32
    return %c0_i32, %c0_i32_0 : i32, i32
  }
  func.func @transform_2(%arg0: i32, %arg1: i32) -> (i32, i32) {
    %c0_i32 = arith.constant 0 : i32
    %c0_i32_0 = arith.constant 0 : i32
    %c0_i32_1 = arith.constant 0 : i32
    return %c0_i32, %c0_i32_0 : i32, i32
  }
  func.func @transform_3(%arg0: i32, %arg1: i32) -> (i32, i32, i32, i32) {
    %c0_i32 = arith.constant 0 : i32
    %c0_i32_0 = arith.constant 0 : i32
    %c0_i32_1 = arith.constant 0 : i32
    return %arg0, %arg1, %c0_i32, %c0_i32_0 : i32, i32, i32, i32
  }
  func.func @transform_4(%arg0: i32, %arg1: i32) -> (i32, i32, i32, i32) {
    %c0_i32 = arith.constant 0 : i32
    %c0_i32_0 = arith.constant 0 : i32
    %c0_i32_1 = arith.constant 0 : i32
    return %arg0, %arg1, %c0_i32, %c0_i32_0 : i32, i32, i32, i32
  }
}

module attributes {stable_mosaic.version = 11 : i64} {
  func.func @_bn_relu_conv2_kernel(%arg0: i32, %arg1: i32, %arg2: memref<2x2x2x4xf32, #tpu.memory_space<vmem>>, %arg3: memref<1x1x10x18x4xf32, #tpu.memory_space<vmem>>, %arg4: memref<36x4xbf16, #tpu.memory_space<vmem>>, %arg5: memref<1x4xf32, #tpu.memory_space<vmem>>, %arg6: memref<1x4xf32, #tpu.memory_space<vmem>>, %arg7: memref<1x4xf32, #tpu.memory_space<vmem>>, %arg8: memref<1x8x16x4xf32, #tpu.memory_space<vmem>>) attributes {dimension_semantics = [#tpu.dimension_semantics<parallel>, #tpu.dimension_semantics<parallel>], iteration_bounds = array<i64: 2, 2>, scalar_prefetch = 0 : i64, scratch_operands = 0 : i64, tpu.core_type = #tpu.core_type<tc>, window_params = [{pipeline_mode = #tpu.pipeline_mode<synchronous>, transform_indices = @transform_0, window_bounds = array<i64: 2, 2, 2, 4>}, {transform_indices = @transform_1, window_bounds = array<i64: 1, 1, 10, 18, 4>}, {pipeline_mode = #tpu.pipeline_mode<synchronous>, transform_indices = @transform_2, window_bounds = array<i64: 36, 4>}, {pipeline_mode = #tpu.pipeline_mode<synchronous>, transform_indices = @transform_3, window_bounds = array<i64: 1, 4>}, {pipeline_mode = #tpu.pipeline_mode<synchronous>, transform_indices = @transform_4, window_bounds = array<i64: 1, 4>}, {pipeline_mode = #tpu.pipeline_mode<synchronous>, transform_indices = @transform_5, window_bounds = array<i64: 1, 4>}, {transform_indices = @transform_6, window_bounds = array<i64: 1, 8, 16, 4>}]} {
    %c0 = arith.constant 0 : index
    %c0_0 = arith.constant 0 : index
    %c0_1 = arith.constant 0 : index
    %c0_2 = arith.constant 0 : index
    %0 = vector.load %arg2[%c0, %c0_0, %c0_1, %c0_2] : memref<2x2x2x4xf32, #tpu.memory_space<vmem>>, vector<2x2x2x4xf32>
    %cst = arith.constant dense<0.000000e+00> : vector<2x4xf32>
    %1 = vector.multi_reduction <add>, %0, %cst [0, 1] : vector<2x2x2x4xf32> to vector<2x4xf32>
    %2 = vector.extract_strided_slice %1 {offsets = [0, 0], sizes = [1, 4], strides = [1, 1]} : vector<2x4xf32> to vector<1x4xf32>
    %cst_3 = arith.constant 5.120000e+02 : f32
    %3 = vector.broadcast %cst_3 : f32 to vector<1x4xf32>
    %4 = arith.divf %2, %3 : vector<1x4xf32>
    %5 = vector.extract_strided_slice %1 {offsets = [1, 0], sizes = [1, 4], strides = [1, 1]} : vector<2x4xf32> to vector<1x4xf32>
    %cst_4 = arith.constant 5.120000e+02 : f32
    %6 = vector.broadcast %cst_4 : f32 to vector<1x4xf32>
    %7 = arith.divf %5, %6 : vector<1x4xf32>
    %8 = arith.mulf %4, %4 : vector<1x4xf32>
    %9 = arith.subf %7, %8 : vector<1x4xf32>
    %cst_5 = arith.constant 9.99999974E-6 : f32
    %10 = vector.broadcast %cst_5 : f32 to vector<1x4xf32>
    %11 = arith.addf %9, %10 : vector<1x4xf32>
    %12 = math.rsqrt %11 : vector<1x4xf32>
    %c0_6 = arith.constant 0 : index
    %c0_7 = arith.constant 0 : index
    %13 = vector.load %arg6[%c0_6, %c0_7] : memref<1x4xf32, #tpu.memory_space<vmem>>, vector<1x4xf32>
    %14 = arith.mulf %13, %12 : vector<1x4xf32>
    %15 = vector.shape_cast %14 : vector<1x4xf32> to vector<1x1x4xf32>
    %c0_8 = arith.constant 0 : index
    %c0_9 = arith.constant 0 : index
    %16 = vector.load %arg7[%c0_8, %c0_9] : memref<1x4xf32, #tpu.memory_space<vmem>>, vector<1x4xf32>
    %c0_10 = arith.constant 0 : index
    %c0_11 = arith.constant 0 : index
    %17 = vector.load %arg6[%c0_10, %c0_11] : memref<1x4xf32, #tpu.memory_space<vmem>>, vector<1x4xf32>
    %18 = arith.mulf %4, %17 : vector<1x4xf32>
    %19 = arith.mulf %18, %12 : vector<1x4xf32>
    %20 = arith.subf %16, %19 : vector<1x4xf32>
    %21 = vector.shape_cast %20 : vector<1x4xf32> to vector<1x1x4xf32>
    %c0_12 = arith.constant 0 : index
    %c0_13 = arith.constant 0 : index
    %c0_14 = arith.constant 0 : index
    %c0_15 = arith.constant 0 : index
    %c0_16 = arith.constant 0 : index
    %22 = vector.load %arg3[%c0_12, %c0_13, %c0_14, %c0_15, %c0_16] : memref<1x1x10x18x4xf32, #tpu.memory_space<vmem>>, vector<1x1x10x18x4xf32>
    %23 = vector.shape_cast %22 : vector<1x1x10x18x4xf32> to vector<10x18x4xf32>
    %24 = vector.broadcast %15 : vector<1x1x4xf32> to vector<10x18x4xf32>
    %25 = arith.mulf %23, %24 : vector<10x18x4xf32>
    %26 = vector.broadcast %21 : vector<1x1x4xf32> to vector<10x18x4xf32>
    %27 = arith.addf %25, %26 : vector<10x18x4xf32>
    %cst_17 = arith.constant 0.000000e+00 : f32
    %28 = vector.broadcast %cst_17 : f32 to vector<10x18x4xf32>
    %29 = arith.maximumf %27, %28 : vector<10x18x4xf32>
    %30 = arith.truncf %29 : vector<10x18x4xf32> to vector<10x18x4xbf16>
    %31 = vector.extract_strided_slice %30 {offsets = [0, 0, 0], sizes = [8, 16, 4], strides = [1, 1, 1]} : vector<10x18x4xbf16> to vector<8x16x4xbf16>
    %32 = vector.extract_strided_slice %30 {offsets = [0, 1, 0], sizes = [8, 16, 4], strides = [1, 1, 1]} : vector<10x18x4xbf16> to vector<8x16x4xbf16>
    %33 = vector.extract_strided_slice %30 {offsets = [0, 2, 0], sizes = [8, 16, 4], strides = [1, 1, 1]} : vector<10x18x4xbf16> to vector<8x16x4xbf16>
    %34 = vector.extract_strided_slice %30 {offsets = [1, 0, 0], sizes = [8, 16, 4], strides = [1, 1, 1]} : vector<10x18x4xbf16> to vector<8x16x4xbf16>
    %35 = vector.extract_strided_slice %30 {offsets = [1, 1, 0], sizes = [8, 16, 4], strides = [1, 1, 1]} : vector<10x18x4xbf16> to vector<8x16x4xbf16>
    %36 = vector.extract_strided_slice %30 {offsets = [1, 2, 0], sizes = [8, 16, 4], strides = [1, 1, 1]} : vector<10x18x4xbf16> to vector<8x16x4xbf16>
    %37 = vector.extract_strided_slice %30 {offsets = [2, 0, 0], sizes = [8, 16, 4], strides = [1, 1, 1]} : vector<10x18x4xbf16> to vector<8x16x4xbf16>
    %38 = vector.extract_strided_slice %30 {offsets = [2, 1, 0], sizes = [8, 16, 4], strides = [1, 1, 1]} : vector<10x18x4xbf16> to vector<8x16x4xbf16>
    %39 = vector.extract_strided_slice %30 {offsets = [2, 2, 0], sizes = [8, 16, 4], strides = [1, 1, 1]} : vector<10x18x4xbf16> to vector<8x16x4xbf16>
    %40 = tpu.concatenate %31, %32, %33, %34, %35, %36, %37, %38, %39 in 2 : vector<8x16x4xbf16>, vector<8x16x4xbf16>, vector<8x16x4xbf16>, vector<8x16x4xbf16>, vector<8x16x4xbf16>, vector<8x16x4xbf16>, vector<8x16x4xbf16>, vector<8x16x4xbf16>, vector<8x16x4xbf16> -> vector<8x16x36xbf16>
    %41 = vector.shape_cast %40 : vector<8x16x36xbf16> to vector<128x36xbf16>
    %c0_18 = arith.constant 0 : index
    %c0_19 = arith.constant 0 : index
    %42 = vector.load %arg4[%c0_18, %c0_19] : memref<36x4xbf16, #tpu.memory_space<vmem>>, vector<36x4xbf16>
    %cst_20 = arith.constant dense<0.000000e+00> : vector<128x4xf32>
    %43 = tpu.matmul %41, %42, %cst_20 {dimension_numbers = #tpu.dot_dimension_numbers<[1], [0], [0], [1], [0, 0, 1, 1], [], []>} : vector<128x36xbf16>, vector<36x4xbf16>, vector<128x4xf32> -> vector<128x4xf32>
    %c0_21 = arith.constant 0 : index
    %c0_22 = arith.constant 0 : index
    %44 = vector.load %arg5[%c0_21, %c0_22] : memref<1x4xf32, #tpu.memory_space<vmem>>, vector<1x4xf32>
    %45 = vector.broadcast %44 : vector<1x4xf32> to vector<128x4xf32>
    %46 = arith.addf %43, %45 : vector<128x4xf32>
    %47 = vector.shape_cast %46 : vector<128x4xf32> to vector<8x16x4xf32>
    %c0_23 = arith.constant 0 : index
    %c0_24 = arith.constant 0 : index
    %c0_25 = arith.constant 0 : index
    %c0_26 = arith.constant 0 : index
    %48 = vector.load %arg8[%c0_23, %c0_24, %c0_25, %c0_26] : memref<1x8x16x4xf32, #tpu.memory_space<vmem>>, vector<1x8x16x4xf32>
    %49 = vector.shape_cast %48 : vector<1x8x16x4xf32> to vector<8x16x4xf32>
    %50 = vector.shape_cast %47 : vector<8x16x4xf32> to vector<1x8x16x4xf32>
    tpu.vector_store %arg8[%c0_23, %c0_24, %c0_25, %c0_26], %50 {strides = array<i32>} : memref<1x8x16x4xf32, #tpu.memory_space<vmem>>, vector<1x8x16x4xf32>,
    return
  }
  func.func @transform_0(%arg0: i32, %arg1: i32) -> (i32, i32, i32, i32) {
    %c0_i32 = arith.constant 0 : i32
    %c0_i32_0 = arith.constant 0 : i32
    %c0_i32_1 = arith.constant 0 : i32
    %c0_i32_2 = arith.constant 0 : i32
    %c0_i32_3 = arith.constant 0 : i32
    return %c0_i32, %c0_i32_0, %c0_i32_1, %c0_i32_2 : i32, i32, i32, i32
  }
  func.func @transform_1(%arg0: i32, %arg1: i32) -> (i32, i32, i32, i32, i32) {
    %c0_i32 = arith.constant 0 : i32
    %c0_i32_0 = arith.constant 0 : i32
    %c0_i32_1 = arith.constant 0 : i32
    %c0_i32_2 = arith.constant 0 : i32
    return %arg0, %arg1, %c0_i32, %c0_i32_0, %c0_i32_1 : i32, i32, i32, i32, i32
  }
  func.func @transform_2(%arg0: i32, %arg1: i32) -> (i32, i32) {
    %c0_i32 = arith.constant 0 : i32
    %c0_i32_0 = arith.constant 0 : i32
    %c0_i32_1 = arith.constant 0 : i32
    return %c0_i32, %c0_i32_0 : i32, i32
  }
  func.func @transform_3(%arg0: i32, %arg1: i32) -> (i32, i32) {
    %c0_i32 = arith.constant 0 : i32
    %c0_i32_0 = arith.constant 0 : i32
    %c0_i32_1 = arith.constant 0 : i32
    return %c0_i32, %c0_i32_0 : i32, i32
  }
  func.func @transform_4(%arg0: i32, %arg1: i32) -> (i32, i32) {
    %c0_i32 = arith.constant 0 : i32
    %c0_i32_0 = arith.constant 0 : i32
    %c0_i32_1 = arith.constant 0 : i32
    return %c0_i32, %c0_i32_0 : i32, i32
  }
  func.func @transform_5(%arg0: i32, %arg1: i32) -> (i32, i32) {
    %c0_i32 = arith.constant 0 : i32
    %c0_i32_0 = arith.constant 0 : i32
    %c0_i32_1 = arith.constant 0 : i32
    return %c0_i32, %c0_i32_0 : i32, i32
  }
  func.func @transform_6(%arg0: i32, %arg1: i32) -> (i32, i32, i32, i32) {
    %c0_i32 = arith.constant 0 : i32
    %c0_i32_0 = arith.constant 0 : i32
    %c0_i32_1 = arith.constant 0 : i32
    return %arg0, %arg1, %c0_i32, %c0_i32_0 : i32, i32, i32, i32
  }
}

module attributes {stable_mosaic.version = 11 : i64} {
  func.func @_upsample_kernel(%arg0: i32, %arg1: i32, %arg2: memref<1x1x16x16xf32, #tpu.memory_space<vmem>>, %arg3: memref<32x16xf32, #tpu.memory_space<vmem>>, %arg4: memref<16x32xf32, #tpu.memory_space<vmem>>, %arg5: memref<1x1x32x32xf32, #tpu.memory_space<vmem>>) attributes {dimension_semantics = [#tpu.dimension_semantics<parallel>, #tpu.dimension_semantics<parallel>], iteration_bounds = array<i64: 2, 4>, scalar_prefetch = 0 : i64, scratch_operands = 0 : i64, tpu.core_type = #tpu.core_type<tc>, window_params = [{transform_indices = @transform_0, window_bounds = array<i64: 1, 1, 16, 16>}, {pipeline_mode = #tpu.pipeline_mode<synchronous>, transform_indices = @transform_1, window_bounds = array<i64: 32, 16>}, {pipeline_mode = #tpu.pipeline_mode<synchronous>, transform_indices = @transform_2, window_bounds = array<i64: 16, 32>}, {transform_indices = @transform_3, window_bounds = array<i64: 1, 1, 32, 32>}]} {
    %c0 = arith.constant 0 : index
    %c0_0 = arith.constant 0 : index
    %0 = vector.load %arg3[%c0, %c0_0] : memref<32x16xf32, #tpu.memory_space<vmem>>, vector<32x16xf32>
    %c0_1 = arith.constant 0 : index
    %c0_2 = arith.constant 0 : index
    %c0_3 = arith.constant 0 : index
    %c0_4 = arith.constant 0 : index
    %1 = vector.load %arg2[%c0_1, %c0_2, %c0_3, %c0_4] : memref<1x1x16x16xf32, #tpu.memory_space<vmem>>, vector<1x1x16x16xf32>
    %2 = vector.shape_cast %1 : vector<1x1x16x16xf32> to vector<16x16xf32>
    %cst = arith.constant dense<0.000000e+00> : vector<32x16xf32>
    %3 = tpu.matmul %0, %2, %cst {dimension_numbers = #tpu.dot_dimension_numbers<[1], [0], [0], [1], [0, 0, 1, 1], [], []>} : vector<32x16xf32>, vector<16x16xf32>, vector<32x16xf32> -> vector<32x16xf32>
    %c0_5 = arith.constant 0 : index
    %c0_6 = arith.constant 0 : index
    %4 = vector.load %arg4[%c0_5, %c0_6] : memref<16x32xf32, #tpu.memory_space<vmem>>, vector<16x32xf32>
    %cst_7 = arith.constant dense<0.000000e+00> : vector<32x32xf32>
    %5 = tpu.matmul %3, %4, %cst_7 {dimension_numbers = #tpu.dot_dimension_numbers<[1], [0], [0], [1], [0, 0, 1, 1], [], []>} : vector<32x16xf32>, vector<16x32xf32>, vector<32x32xf32> -> vector<32x32xf32>
    %c0_8 = arith.constant 0 : index
    %c0_9 = arith.constant 0 : index
    %c0_10 = arith.constant 0 : index
    %c0_11 = arith.constant 0 : index
    %6 = vector.load %arg5[%c0_8, %c0_9, %c0_10, %c0_11] : memref<1x1x32x32xf32, #tpu.memory_space<vmem>>, vector<1x1x32x32xf32>
    %7 = vector.shape_cast %6 : vector<1x1x32x32xf32> to vector<32x32xf32>
    %8 = vector.shape_cast %5 : vector<32x32xf32> to vector<1x1x32x32xf32>
    tpu.vector_store %arg5[%c0_8, %c0_9, %c0_10, %c0_11], %8 {strides = array<i32>} : memref<1x1x32x32xf32, #tpu.memory_space<vmem>>, vector<1x1x32x32xf32>,
    return
  }
  func.func @transform_0(%arg0: i32, %arg1: i32) -> (i32, i32, i32, i32) {
    %c0_i32 = arith.constant 0 : i32
    %c0_i32_0 = arith.constant 0 : i32
    %c0_i32_1 = arith.constant 0 : i32
    return %arg0, %arg1, %c0_i32, %c0_i32_0 : i32, i32, i32, i32
  }
  func.func @transform_1(%arg0: i32, %arg1: i32) -> (i32, i32) {
    %c0_i32 = arith.constant 0 : i32
    %c0_i32_0 = arith.constant 0 : i32
    %c0_i32_1 = arith.constant 0 : i32
    return %c0_i32, %c0_i32_0 : i32, i32
  }
  func.func @transform_2(%arg0: i32, %arg1: i32) -> (i32, i32) {
    %c0_i32 = arith.constant 0 : i32
    %c0_i32_0 = arith.constant 0 : i32
    %c0_i32_1 = arith.constant 0 : i32
    return %c0_i32, %c0_i32_0 : i32, i32
  }
  func.func @transform_3(%arg0: i32, %arg1: i32) -> (i32, i32, i32, i32) {
    %c0_i32 = arith.constant 0 : i32
    %c0_i32_0 = arith.constant 0 : i32
    %c0_i32_1 = arith.constant 0 : i32
    return %arg0, %arg1, %c0_i32, %c0_i32_0 : i32, i32, i32, i32
  }
}

</mosaic_0001>

<llo_original>
// kernel: ao_forward.3
$region0: #{ao_forward.3}
  #allocation0 [shape = 'u32[]', space=smem, size = 0x4, offset = 0x4, fixed_abs, tag = 'smem constant byte address 0x4 - core index']
  #allocation1 [shape = 'u32[144,128]{1,0:T(1,128)}', space=vmem, size = 0x12000, scoped, tag = 'internal scratch']
  %s0 = inlined_call_operand.vmem [shape: bf16[2,2,10,18,8], index: 0, kind: input, shape index: {}]
  %s1 = inlined_call_operand.vmem [shape: bf16[72,4], index: 1, kind: input, shape index: {}]
  %s2 = inlined_call_operand.vmem [shape: f32[1,4], index: 2, kind: input, shape index: {}]
  %s3 = inlined_call_operand.vmem [shape: f32[2,16,16,4], index: 3, kind: output, shape index: {0}]
  %s4 = inlined_call_operand.vmem [shape: f32[2,2,2,4], index: 4, kind: output, shape index: {1}]
  %5 = xla_tuple %s3, %s4
  %s6 = sld [smem:[#allocation0]]
  $region53: #{ao_forward.3} parent=0
    _
  %s8 = ssub.s32 1, %s6
  %s9 = scalar_select 0, %s8, %s6
  loop: start=0, step=1, limit=6
  $region2: #{ao_forward.3} parent=0 // loop_pre_header
    _
  $region3: #{ao_forward.3} parent=0 // loop_header
    %s11 = sphi 0, %s15
    %p12 = scmp.ge.s32.totalorder %s11, 6
    %s18 = sphi 0, %s30
    %s19 = sphi 0, %s26
    %s20 = sphi 0, %s18
    %s21 = sphi 0, %s19
    %s22 = sphi 0, %s20
    %s23 = sphi 0, %s21
    %s35 = sphi 0, %s37
    %s38 = sphi 0, %s35
    %s39 = sphi 0, %s38
    %s55 = sphi 0, %s39
    %s59 = sphi 0, %s59
    %s61 = sphi 0, %s59
    %s62 = sphi 0, %s61
    %s76 = sphi 0, %s62
    %s80 = sphi 0, %s80
    %s82 = sphi 0, %s80
    %s83 = sphi 0, %s82
    %s97 = sphi 0, %s83
    %s105 = sphi 0, %s107
    %s108 = sphi 0, %s105
    %s109 = sphi 0, %s108
    %s125 = sphi 0, %s109
    %s133 = sphi 0, %s135
    %s136 = sphi 0, %s133
    %s137 = sphi 0, %s136
    %s153 = sphi 0, %s137
  $region4: #{ao_forward.3} parent=0 // loop_header_branch
    %14 = sbr.rel (%p12) target = $region8
  $region5: #{ao_forward.3} parent=0 // loop_body
    %s16 = ssub.s32 %s11, 1
    %s17 = ssub.s32 %s11, 2
    %s24 = sadd.s32 1, %s19
    %p25 = scmp.ge.s32.totalorder %s24, 2
    %s26 = scalar_select %p25, 0, %s24
    %s27 = sadd.s32 1, %s18
    %s28 = scalar_select %p25, %s27, %s18
    %p29 = scmp.ge.s32.totalorder %s28, 2
    %s30 = scalar_select %p29, 0, %s28
    %s31 = ssub.s32 %s18, %s30
    %s32 = ssub.s32 %s19, %s26
    %s33 = sor.u32 %s31, %s32
    %p34 = scmp.eq.s32.totalorder %s33, 0
    %s36 = sadd.s32 %s35, 1
    %s37 = scalar_select %p34, %s35, %s36
    %p40 = pneg %p34
    %p41 = scmp.eq.s32.totalorder %s11, 3
    %p42 = por %p40, %p41
    %p43 = scmp.ne.s32.totalorder %s35, %s38
    %p44 = scmp.eq.s32.totalorder %s11, 0
    %p45 = por %p43, %p44
    %p46 = scmp.ne.s32.totalorder %s35, %s38
    %p47 = scmp.eq.s32.totalorder %s16, 3
    %p48 = por %p46, %p47
    %p49 = scmp.ne.s32.totalorder %s38, %s39
    %p50 = scmp.eq.s32.totalorder %s16, 0
    %p51 = por %p49, %p50
    %p52 = scmp.ne.s32.totalorder %s38, %s39
    %p53 = scmp.eq.s32.totalorder %s17, 3
    %p54 = por %p52, %p53
    %p56 = scmp.ne.s32.totalorder %s39, %s55
    %p57 = scmp.eq.s32.totalorder %s17, 0
    %p58 = por %p56, %p57
    %s60 = sadd.s32 %s59, 1
    %p63 = scmp.eq.s32.totalorder %s11, 3
    %p64 = scmp.ne.s32.totalorder %s59, %s61
    %p65 = scmp.eq.s32.totalorder %s11, 0
    %p66 = por %p64, %p65
    %p67 = scmp.ne.s32.totalorder %s59, %s61
    %p68 = scmp.eq.s32.totalorder %s16, 3
    %p69 = por %p67, %p68
    %p70 = scmp.ne.s32.totalorder %s61, %s62
    %p71 = scmp.eq.s32.totalorder %s16, 0
    %p72 = por %p70, %p71
    %p73 = scmp.ne.s32.totalorder %s61, %s62
    %p74 = scmp.eq.s32.totalorder %s17, 3
    %p75 = por %p73, %p74
    %p77 = scmp.ne.s32.totalorder %s62, %s76
    %p78 = scmp.eq.s32.totalorder %s17, 0
    %p79 = por %p77, %p78
    %s81 = sadd.s32 %s80, 1
    %p84 = scmp.eq.s32.totalorder %s11, 3
    %p85 = scmp.ne.s32.totalorder %s80, %s82
    %p86 = scmp.eq.s32.totalorder %s11, 0
    %p87 = por %p85, %p86
    %p88 = scmp.ne.s32.totalorder %s80, %s82
    %p89 = scmp.eq.s32.totalorder %s16, 3
    %p90 = por %p88, %p89
    %p91 = scmp.ne.s32.totalorder %s82, %s83
    %p92 = scmp.eq.s32.totalorder %s16, 0
    %p93 = por %p91, %p92
    %p94 = scmp.ne.s32.totalorder %s82, %s83
    %p95 = scmp.eq.s32.totalorder %s17, 3
    %p96 = por %p94, %p95
    %p98 = scmp.ne.s32.totalorder %s83, %s97
    %p99 = scmp.eq.s32.totalorder %s17, 0
    %p100 = por %p98, %p99
    %s101 = ssub.s32 %s18, %s30
    %s102 = ssub.s32 %s19, %s26
    %s103 = sor.u32 %s101, %s102
    %p104 = scmp.eq.s32.totalorder %s103, 0
    %s106 = sadd.s32 %s105, 1
    %s107 = scalar_select %p104, %s105, %s106
    %p110 = pneg %p104
    %p111 = scmp.eq.s32.totalorder %s11, 3
    %p112 = por %p110, %p111
    %p113 = scmp.ne.s32.totalorder %s105, %s108
    %p114 = scmp.eq.s32.totalorder %s11, 0
    %p115 = por %p113, %p114
    %p116 = scmp.ne.s32.totalorder %s105, %s108
    %p117 = scmp.eq.s32.totalorder %s16, 3
    %p118 = por %p116, %p117
    %p119 = scmp.ne.s32.totalorder %s108, %s109
    %p120 = scmp.eq.s32.totalorder %s16, 0
    %p121 = por %p119, %p120
    %p122 = scmp.ne.s32.totalorder %s108, %s109
    %p123 = scmp.eq.s32.totalorder %s17, 3
    %p124 = por %p122, %p123
    %p126 = scmp.ne.s32.totalorder %s109, %s125
    %p127 = scmp.eq.s32.totalorder %s17, 0
    %p128 = por %p126, %p127
    %s129 = ssub.s32 %s18, %s30
    %s130 = ssub.s32 %s19, %s26
    %s131 = sor.u32 %s129, %s130
    %p132 = scmp.eq.s32.totalorder %s131, 0
    %s134 = sadd.s32 %s133, 1
    %s135 = scalar_select %p132, %s133, %s134
    %p138 = pneg %p132
    %p139 = scmp.eq.s32.totalorder %s11, 3
    %p140 = por %p138, %p139
    %p141 = scmp.ne.s32.totalorder %s133, %s136
    %p142 = scmp.eq.s32.totalorder %s11, 0
    %p143 = por %p141, %p142
    %p144 = scmp.ne.s32.totalorder %s133, %s136
    %p145 = scmp.eq.s32.totalorder %s16, 3
    %p146 = por %p144, %p145
    %p147 = scmp.ne.s32.totalorder %s136, %s137
    %p148 = scmp.eq.s32.totalorder %s16, 0
    %p149 = por %p147, %p148
    %p150 = scmp.ne.s32.totalorder %s136, %s137
    %p151 = scmp.eq.s32.totalorder %s17, 3
    %p152 = por %p150, %p151
    %p154 = scmp.ne.s32.totalorder %s137, %s153
    %p155 = scmp.eq.s32.totalorder %s17, 0
    %p156 = por %p154, %p155
    %p157 = scmp.le.s32.totalorder 1, %s11
    %p158 = scmp.lt.s32.totalorder %s11, 5
    %p159 = pnand %p157, %p158
    %p160 = pneg %p159
    // Predicated region
    $region9: #{ao_forward.3} parent=5 // pred_check
      _
    $region10: #{ao_forward.3} parent=5 // pred_check_branch
      %162 = sbr.rel (%p159) target = $region12
    $region11: #{ao_forward.3} parent=5 // pred_region
      %s163 = ssub.s32 %s11, 1
      // Predicated region
      $region13: #{ao_forward.3} parent=11 // pred_check
        %p164 = pneg %p72
      $region14: #{ao_forward.3} parent=11 // pred_check_branch
        %166 = sbr.rel (%p164) target = $region16
      $region15: #{ao_forward.3} parent=11 // pred_region
        _
      $region16: #{ao_forward.3} parent=11 // pred_fallthru
        _
      // Predicated region
      $region17: #{ao_forward.3} parent=11 // pred_check
        %p167 = pneg %p93
      $region18: #{ao_forward.3} parent=11 // pred_check_branch
        %169 = sbr.rel (%p167) target = $region20
      $region19: #{ao_forward.3} parent=11 // pred_region
        _
      $region20: #{ao_forward.3} parent=11 // pred_fallthru
        _
    $region12: #{ao_forward.3} parent=5 // pred_fallthru
      _
    %p170 = scmp.lt.s32.totalorder %s11, 4
    // Predicated region
    $region21: #{ao_forward.3} parent=5 // pred_check
      %p171 = pneg %p170
    $region22: #{ao_forward.3} parent=5 // pred_check_branch
      %173 = sbr.rel (%p171) target = $region24
    $region23: #{ao_forward.3} parent=5 // pred_region
      // Predicated region
      $region25: #{ao_forward.3} parent=23 // pred_check
        %p174 = pneg %p45
      $region26: #{ao_forward.3} parent=23 // pred_check_branch
        %176 = sbr.rel (%p174) target = $region28
      $region27: #{ao_forward.3} parent=23 // pred_region
        %p177 = scmp.lt.s32.totalorder %s18, 1
        %s178 = scalar_select %p177, %s18, 1
        %p179 = scmp.lt.s32.totalorder %s19, 1
        %s180 = scalar_select %p179, %s19, 1
        %s181 = smul.addr %s180, 30
        %s182 = smul.addr %s178, 60
        %s183 = sadd.s32 %s181, %s182
        %s184 = smul.addr %s183, 4
        %s185 = scalar_lea.vmem %s0, %s184
      $region28: #{ao_forward.3} parent=23 // pred_fallthru
        _
    $region24: #{ao_forward.3} parent=5 // pred_fallthru
      _
    %p186 = scmp.le.s32.totalorder 1, %s11
    %p187 = scmp.lt.s32.totalorder %s11, 5
    %p188 = pnand %p186, %p187
    %p189 = pneg %p188
    // Predicated region
    $region29: #{ao_forward.3} parent=5 // pred_check
      _
    $region30: #{ao_forward.3} parent=5 // pred_check_branch
      %191 = sbr.rel (%p188) target = $region32
    $region31: #{ao_forward.3} parent=5 // pred_region
      %s192 = ssub.s32 %s11, 1
      %p193 = scmp.lt.s32.totalorder %s20, 1
      %s194 = scalar_select %p193, %s20, 1
      %p195 = scmp.lt.s32.totalorder %s21, 1
      %s196 = scalar_select %p195, %s21, 1
      %s197 = smul.addr %s196, 30
      %s198 = smul.addr %s194, 60
      %s199 = sadd.s32 %s197, %s198
      %s200 = smul.addr %s199, 4
      %s201 = scalar_lea.vmem %s0, %s200
      %p202 = pneg %p51
      %p203 = pneg %p48
      %p204 = pneg %p72
      %p205 = pneg %p69
      %p206 = pneg %p93
      %p207 = pneg %p90
      %p208 = pneg %p121
      %p209 = pneg %p118
      %s210 = smul.u32 8, %s21
      %p211 = scmp.lt.s32.totalorder %s20, 1
      %s212 = scalar_select %p211, %s20, 1
      %p213 = scmp.lt.s32.totalorder %s210, 15
      %s214 = scalar_select %p213, %s210, 15
      %s215 = smul.addr %s214, 2
      %s216 = smul.addr %s212, 32
      %s217 = sadd.s32 %s215, %s216
      %s218 = smul.addr %s217, 8
      %s219 = scalar_lea.vmem %s3, %s218
      %p220 = pneg %p149
      %p221 = pneg %p146
      %p222 = scmp.lt.s32.totalorder %s20, 1
      %s223 = scalar_select %p222, %s20, 1
      %p224 = scmp.lt.s32.totalorder %s21, 1
      %s225 = scalar_select %p224, %s21, 1
      %s226 = smul.addr %s223, 2
      %s227 = sadd.s32 %s225, %s226
      %s228 = smul.addr %s227, 2
      %s229 = scalar_lea.vmem %s4, %s228
      %p230 = scmp.lt.s32.totalorder %s20, 1
      %s231 = scalar_select %p230, %s20, 1
      %p232 = scmp.lt.s32.totalorder %s21, 1
      %s233 = scalar_select %p232, %s21, 1
      %s234 = smul.addr %s233, 30
      %s235 = smul.addr %s231, 60
      %s236 = sadd.s32 %s234, %s235
      %s237 = smul.addr %s236, 4
      %s238 = scalar_lea.vmem %s0, %s237
      %s239 = smul.u32 8, %s21
      %p240 = scmp.lt.s32.totalorder %s20, 1
      %s241 = scalar_select %p240, %s20, 1
      %p242 = scmp.lt.s32.totalorder %s239, 15
      %s243 = scalar_select %p242, %s239, 15
      %s244 = smul.addr %s243, 2
      %s245 = smul.addr %s241, 32
      %s246 = sadd.s32 %s244, %s245
      %s247 = smul.addr %s246, 8
      %s248 = scalar_lea.vmem %s3, %s247
      %s249 = smul.u32 8, %s21
      %p250 = scmp.lt.s32.totalorder %s20, 1
      %s251 = scalar_select %p250, %s20, 1
      %p252 = scmp.lt.s32.totalorder %s21, 1
      %s253 = scalar_select %p252, %s21, 1
      %s254 = smul.addr %s251, 2
      %s255 = sadd.s32 %s253, %s254
      %s256 = smul.addr %s255, 2
      %s257 = scalar_lea.vmem %s4, %s256
      %v259 = vld [vmem:[%s238] sm:$0xf]
      %v260 = vld [vmem:[%s238 + $0x4] sm:$0xf]
      %v261 = vld [vmem:[%s238 + $0x8] sm:$0x1]
      %v262 = vld [vmem:[%s238 + $0xc] sm:$0xf]
      %v263 = vld [vmem:[%s238 + $0x10] sm:$0xf]
      %v264 = vld [vmem:[%s238 + $0x14] sm:$0x1]
      %v265 = vld [vmem:[%s238 + $0x18] sm:$0xf]
      %v266 = vld [vmem:[%s238 + $0x1c] sm:$0xf]
      %v267 = vld [vmem:[%s238 + $0x20] sm:$0x1]
      %v268 = vld [vmem:[%s238 + $0x24] sm:$0xf]
      %v269 = vld [vmem:[%s238 + $0x28] sm:$0xf]
      %v270 = vld [vmem:[%s238 + $0x2c] sm:$0x1]
      %v271 = vld [vmem:[%s238 + $0x30] sm:$0xf]
      %v272 = vld [vmem:[%s238 + $0x34] sm:$0xf]
      %v273 = vld [vmem:[%s238 + $0x38] sm:$0x1]
      %v274 = vld [vmem:[%s238 + $0x3c] sm:$0xf]
      %v275 = vld [vmem:[%s238 + $0x40] sm:$0xf]
      %v276 = vld [vmem:[%s238 + $0x44] sm:$0x1]
      %v277 = vld [vmem:[%s238 + $0x48] sm:$0xf]
      %v278 = vld [vmem:[%s238 + $0x4c] sm:$0xf]
      %v279 = vld [vmem:[%s238 + $0x50] sm:$0x1]
      %v280 = vld [vmem:[%s238 + $0x54] sm:$0xf]
      %v281 = vld [vmem:[%s238 + $0x58] sm:$0xf]
      %v282 = vld [vmem:[%s238 + $0x5c] sm:$0x1]
      %v283 = vld [vmem:[%s238 + $0x60] sm:$0xf]
      %v284 = vld [vmem:[%s238 + $0x64] sm:$0xf]
      %v285 = vld [vmem:[%s238 + $0x68] sm:$0x1]
      %v286 = vld [vmem:[%s238 + $0x6c] sm:$0xf]
      %v287 = vld [vmem:[%s238 + $0x70] sm:$0xf]
      %v288 = vld [vmem:[%s238 + $0x74] sm:$0x1]
      %v305 = vunpack.c.l.b16 %v259
      %v306 = vunpack.c.l.b16 %v260
      %v307 = vunpack.c.l.b16 %v262
      %v308 = vunpack.c.l.b16 %v263
      %v309 = vunpack.c.l.b16 %v265
      %v310 = vunpack.c.l.b16 %v266
      %v311 = vunpack.c.l.b16 %v268
      %v312 = vunpack.c.l.b16 %v269
      %v313 = vunpack.c.l.b16 %v271
      %v314 = vunpack.c.l.b16 %v272
      %v315 = vunpack.c.l.b16 %v274
      %v316 = vunpack.c.l.b16 %v275
      %v317 = vunpack.c.l.b16 %v277
      %v318 = vunpack.c.l.b16 %v278
      %v319 = vunpack.c.l.b16 %v280
      %v320 = vunpack.c.l.b16 %v281
      %v321 = vpack.c.b16 %v306, %v305
      %v322 = vpack.c.b16 %v308, %v307
      %v323 = vpack.c.b16 %v310, %v309
      %v324 = vpack.c.b16 %v312, %v311
      %v325 = vpack.c.b16 %v314, %v313
      %v326 = vpack.c.b16 %v316, %v315
      %v327 = vpack.c.b16 %v318, %v317
      %v328 = vpack.c.b16 %v320, %v319
      %v337 = vunpack.c.l.b16 %v261
      %v338 = vunpack.c.l.b16 %v264
      %v339 = vunpack.c.l.b16 %v267
      %v340 = vunpack.c.l.b16 %v270
      %v341 = vunpack.c.l.b16 %v273
      %v342 = vunpack.c.l.b16 %v276
      %v343 = vunpack.c.l.b16 %v279
      %v344 = vunpack.c.l.b16 %v282
      %v345 = vpack.c.b16 %v337, %v337
      %v346 = vpack.c.b16 %v338, %v338
      %v347 = vpack.c.b16 %v339, %v339
      %v348 = vpack.c.b16 %v340, %v340
      %v349 = vpack.c.b16 %v341, %v341
      %v350 = vpack.c.b16 %v342, %v342
      %v351 = vpack.c.b16 %v343, %v343
      %v352 = vpack.c.b16 %v344, %v344
      %vm353 = vsmask.f32 7424
      %v355 = vshrl.u32 %v321, 16
      %v357 = vshll.u32 %v321, 16
      %v359 = vrot.slane %v357, 1
      %v360 = vor.u32 %v355, %v359
      %v362 = vshll.u32 %v345, 16
      %v364 = vrot.slane %v362, 1
      %v365 = vsel %vm353, %v360, %v364
      %v367 = vshrl.u32 %v322, 16
      %v369 = vshll.u32 %v322, 16
      %v371 = vrot.slane %v369, 1
      %v372 = vor.u32 %v367, %v371
      %v374 = vshll.u32 %v346, 16
      %v376 = vrot.slane %v374, 1
      %v377 = vsel %vm353, %v372, %v376
      %v379 = vshrl.u32 %v323, 16
      %v381 = vshll.u32 %v323, 16
      %v383 = vrot.slane %v381, 1
      %v384 = vor.u32 %v379, %v383
      %v386 = vshll.u32 %v347, 16
      %v388 = vrot.slane %v386, 1
      %v389 = vsel %vm353, %v384, %v388
      %v391 = vshrl.u32 %v324, 16
      %v393 = vshll.u32 %v324, 16
      %v395 = vrot.slane %v393, 1
      %v396 = vor.u32 %v391, %v395
      %v398 = vshll.u32 %v348, 16
      %v400 = vrot.slane %v398, 1
      %v401 = vsel %vm353, %v396, %v400
      %v403 = vshrl.u32 %v325, 16
      %v405 = vshll.u32 %v325, 16
      %v407 = vrot.slane %v405, 1
      %v408 = vor.u32 %v403, %v407
      %v410 = vshll.u32 %v349, 16
      %v412 = vrot.slane %v410, 1
      %v413 = vsel %vm353, %v408, %v412
      %v415 = vshrl.u32 %v326, 16
      %v417 = vshll.u32 %v326, 16
      %v419 = vrot.slane %v417, 1
      %v420 = vor.u32 %v415, %v419
      %v422 = vshll.u32 %v350, 16
      %v424 = vrot.slane %v422, 1
      %v425 = vsel %vm353, %v420, %v424
      %v427 = vshrl.u32 %v327, 16
      %v429 = vshll.u32 %v327, 16
      %v431 = vrot.slane %v429, 1
      %v432 = vor.u32 %v427, %v431
      %v434 = vshll.u32 %v351, 16
      %v436 = vrot.slane %v434, 1
      %v437 = vsel %vm353, %v432, %v436
      %v439 = vshrl.u32 %v328, 16
      %v441 = vshll.u32 %v328, 16
      %v443 = vrot.slane %v441, 1
      %v444 = vor.u32 %v439, %v443
      %v446 = vshll.u32 %v352, 16
      %v448 = vrot.slane %v446, 1
      %v449 = vsel %vm353, %v444, %v448
      %450 = vrot.lane.b32.xlu0 %v365, 8
      %v451 = vpop.permute.xlu0 %450
      %452 = vrot.lane.b32.xlu0 %v377, 8
      %v453 = vpop.permute.xlu0 %452
      %454 = vrot.lane.b32.xlu0 %v389, 8
      %v455 = vpop.permute.xlu0 %454
      %456 = vrot.lane.b32.xlu0 %v401, 8
      %v457 = vpop.permute.xlu0 %456
      %458 = vrot.lane.b32.xlu0 %v413, 8
      %v459 = vpop.permute.xlu0 %458
      %460 = vrot.lane.b32.xlu0 %v425, 8
      %v461 = vpop.permute.xlu0 %460
      %462 = vrot.lane.b32.xlu0 %v437, 8
      %v463 = vpop.permute.xlu0 %462
      %464 = vrot.lane.b32.xlu0 %v449, 8
      %v465 = vpop.permute.xlu0 %464
      %vm466 = vcmask 1046528
      %v467 = vrot.slane %v321, 1
      %v468 = vrot.slane %v345, 1
      %v469 = vsel %vm466, %v467, %v468
      %v470 = vrot.slane %v322, 1
      %v471 = vrot.slane %v346, 1
      %v472 = vsel %vm466, %v470, %v471
      %v473 = vrot.slane %v323, 1
      %v474 = vrot.slane %v347, 1
      %v475 = vsel %vm466, %v473, %v474
      %v476 = vrot.slane %v324, 1
      %v477 = vrot.slane %v348, 1
      %v478 = vsel %vm466, %v476, %v477
      %v479 = vrot.slane %v325, 1
      %v480 = vrot.slane %v349, 1
      %v481 = vsel %vm466, %v479, %v480
      %v482 = vrot.slane %v326, 1
      %v483 = vrot.slane %v350, 1
      %v484 = vsel %vm466, %v482, %v483
      %v485 = vrot.slane %v327, 1
      %v486 = vrot.slane %v351, 1
      %v487 = vsel %vm466, %v485, %v486
      %v488 = vrot.slane %v328, 1
      %v489 = vrot.slane %v352, 1
      %v490 = vsel %vm466, %v488, %v489
      %491 = vrot.lane.b32.xlu0 %v469, 16
      %v492 = vpop.permute.xlu0 %491
      %493 = vrot.lane.b32.xlu0 %v472, 16
      %v494 = vpop.permute.xlu0 %493
      %495 = vrot.lane.b32.xlu0 %v475, 16
      %v496 = vpop.permute.xlu0 %495
      %497 = vrot.lane.b32.xlu0 %v478, 16
      %v498 = vpop.permute.xlu0 %497
      %499 = vrot.lane.b32.xlu0 %v481, 16
      %v500 = vpop.permute.xlu0 %499
      %501 = vrot.lane.b32.xlu0 %v484, 16
      %v502 = vpop.permute.xlu0 %501
      %503 = vrot.lane.b32.xlu0 %v487, 16
      %v504 = vpop.permute.xlu0 %503
      %505 = vrot.lane.b32.xlu0 %v490, 16
      %v506 = vpop.permute.xlu0 %505
      %v509 = vunpack.c.l.b16 %v283
      %v510 = vunpack.c.l.b16 %v284
      %v511 = vpack.c.b16 %v510, %v509
      %512 = vrot.lane.b32.xlu0 %v322, 24
      %v513 = vpop.permute.xlu0 %512
      %514 = vrot.lane.b32.xlu0 %v323, 24
      %v515 = vpop.permute.xlu0 %514
      %516 = vrot.lane.b32.xlu0 %v324, 24
      %v517 = vpop.permute.xlu0 %516
      %518 = vrot.lane.b32.xlu0 %v325, 24
      %v519 = vpop.permute.xlu0 %518
      %520 = vrot.lane.b32.xlu0 %v326, 24
      %v521 = vpop.permute.xlu0 %520
      %522 = vrot.lane.b32.xlu0 %v327, 24
      %v523 = vpop.permute.xlu0 %522
      %524 = vrot.lane.b32.xlu0 %v328, 24
      %v525 = vpop.permute.xlu0 %524
      %526 = vrot.lane.b32.xlu0 %v511, 24
      %v527 = vpop.permute.xlu0 %526
      %v529 = vunpack.c.l.b16 %v285
      %v530 = vpack.c.b16 %v529, %v529
      %v532 = vshrl.u32 %v511, 16
      %v534 = vshll.u32 %v511, 16
      %v536 = vrot.slane %v534, 1
      %v537 = vor.u32 %v532, %v536
      %v539 = vshll.u32 %v530, 16
      %v541 = vrot.slane %v539, 1
      %v542 = vsel %vm353, %v537, %v541
      %543 = vrot.lane.b32.xlu0 %v377, 32
      %v544 = vpop.permute.xlu0 %543
      %545 = vrot.lane.b32.xlu0 %v389, 32
      %v546 = vpop.permute.xlu0 %545
      %547 = vrot.lane.b32.xlu0 %v401, 32
      %v548 = vpop.permute.xlu0 %547
      %549 = vrot.lane.b32.xlu0 %v413, 32
      %v550 = vpop.permute.xlu0 %549
      %551 = vrot.lane.b32.xlu0 %v425, 32
      %v552 = vpop.permute.xlu0 %551
      %553 = vrot.lane.b32.xlu0 %v437, 32
      %v554 = vpop.permute.xlu0 %553
      %555 = vrot.lane.b32.xlu0 %v449, 32
      %v556 = vpop.permute.xlu0 %555
      %557 = vrot.lane.b32.xlu0 %v542, 32
      %v558 = vpop.permute.xlu0 %557
      %v559 = vrot.slane %v511, 1
      %v560 = vrot.slane %v530, 1
      %v561 = vsel %vm466, %v559, %v560
      %562 = vrot.lane.b32.xlu0 %v472, 40
      %v563 = vpop.permute.xlu0 %562
      %564 = vrot.lane.b32.xlu0 %v475, 40
      %v565 = vpop.permute.xlu0 %564
      %566 = vrot.lane.b32.xlu0 %v478, 40
      %v567 = vpop.permute.xlu0 %566
      %568 = vrot.lane.b32.xlu0 %v481, 40
      %v569 = vpop.permute.xlu0 %568
      %570 = vrot.lane.b32.xlu0 %v484, 40
      %v571 = vpop.permute.xlu0 %570
      %572 = vrot.lane.b32.xlu0 %v487, 40
      %v573 = vpop.permute.xlu0 %572
      %574 = vrot.lane.b32.xlu0 %v490, 40
      %v575 = vpop.permute.xlu0 %574
      %576 = vrot.lane.b32.xlu0 %v561, 40
      %v577 = vpop.permute.xlu0 %576
      %v580 = vunpack.c.l.b16 %v286
      %v581 = vunpack.c.l.b16 %v287
      %v582 = vpack.c.b16 %v581, %v580
      %583 = vrot.lane.b32.xlu0 %v323, 48
      %v584 = vpop.permute.xlu0 %583
      %585 = vrot.lane.b32.xlu0 %v324, 48
      %v586 = vpop.permute.xlu0 %585
      %587 = vrot.lane.b32.xlu0 %v325, 48
      %v588 = vpop.permute.xlu0 %587
      %589 = vrot.lane.b32.xlu0 %v326, 48
      %v590 = vpop.permute.xlu0 %589
      %591 = vrot.lane.b32.xlu0 %v327, 48
      %v592 = vpop.permute.xlu0 %591
      %593 = vrot.lane.b32.xlu0 %v328, 48
      %v594 = vpop.permute.xlu0 %593
      %595 = vrot.lane.b32.xlu0 %v511, 48
      %v596 = vpop.permute.xlu0 %595
      %597 = vrot.lane.b32.xlu0 %v582, 48
      %v598 = vpop.permute.xlu0 %597
      %v600 = vunpack.c.l.b16 %v288
      %v601 = vpack.c.b16 %v600, %v600
      %v603 = vshrl.u32 %v582, 16
      %v605 = vshll.u32 %v582, 16
      %v607 = vrot.slane %v605, 1
      %v608 = vor.u32 %v603, %v607
      %v610 = vshll.u32 %v601, 16
      %v612 = vrot.slane %v610, 1
      %v613 = vsel %vm353, %v608, %v612
      %614 = vrot.lane.b32.xlu0 %v389, 56
      %v615 = vpop.permute.xlu0 %614
      %616 = vrot.lane.b32.xlu0 %v401, 56
      %v617 = vpop.permute.xlu0 %616
      %618 = vrot.lane.b32.xlu0 %v413, 56
      %v619 = vpop.permute.xlu0 %618
      %620 = vrot.lane.b32.xlu0 %v425, 56
      %v621 = vpop.permute.xlu0 %620
      %622 = vrot.lane.b32.xlu0 %v437, 56
      %v623 = vpop.permute.xlu0 %622
      %624 = vrot.lane.b32.xlu0 %v449, 56
      %v625 = vpop.permute.xlu0 %624
      %626 = vrot.lane.b32.xlu0 %v542, 56
      %v627 = vpop.permute.xlu0 %626
      %628 = vrot.lane.b32.xlu0 %v613, 56
      %v629 = vpop.permute.xlu0 %628
      %v630 = vrot.slane %v582, 1
      %v631 = vrot.slane %v601, 1
      %v632 = vsel %vm466, %v630, %v631
      %633 = vrot.lane.b32.xlu0 %v475, 64
      %v634 = vpop.permute.xlu0 %633
      %635 = vrot.lane.b32.xlu0 %v478, 64
      %v636 = vpop.permute.xlu0 %635
      %637 = vrot.lane.b32.xlu0 %v481, 64
      %v638 = vpop.permute.xlu0 %637
      %639 = vrot.lane.b32.xlu0 %v484, 64
      %v640 = vpop.permute.xlu0 %639
      %641 = vrot.lane.b32.xlu0 %v487, 64
      %v642 = vpop.permute.xlu0 %641
      %643 = vrot.lane.b32.xlu0 %v490, 64
      %v644 = vpop.permute.xlu0 %643
      %645 = vrot.lane.b32.xlu0 %v561, 64
      %v646 = vpop.permute.xlu0 %645
      %647 = vrot.lane.b32.xlu0 %v632, 64
      %v648 = vpop.permute.xlu0 %647
      %vm649 = vcmask 64512
      %v651 = vsel %vm649, %v321, %v451
      %v653 = vsel %vm649, %v322, %v453
      %v655 = vsel %vm649, %v323, %v455
      %v657 = vsel %vm649, %v324, %v457
      %v659 = vsel %vm649, %v325, %v459
      %v661 = vsel %vm649, %v326, %v461
      %v663 = vsel %vm649, %v327, %v463
      %v665 = vsel %vm649, %v328, %v465
      %vm666 = vcmask 130048
      %v668 = vsel %vm666, %v651, %v492
      %v670 = vsel %vm666, %v653, %v494
      %v672 = vsel %vm666, %v655, %v496
      %v674 = vsel %vm666, %v657, %v498
      %v676 = vsel %vm666, %v659, %v500
      %v678 = vsel %vm666, %v661, %v502
      %v680 = vsel %vm666, %v663, %v504
      %v682 = vsel %vm666, %v665, %v506
      %vm683 = vcmask 195584
      %v685 = vsel %vm683, %v668, %v513
      %v687 = vsel %vm683, %v670, %v515
      %v689 = vsel %vm683, %v672, %v517
      %v691 = vsel %vm683, %v674, %v519
      %v693 = vsel %vm683, %v676, %v521
      %v695 = vsel %vm683, %v678, %v523
      %v697 = vsel %vm683, %v680, %v525
      %v699 = vsel %vm683, %v682, %v527
      %vm700 = vcmask 261120
      %v702 = vsel %vm700, %v685, %v544
      %v704 = vsel %vm700, %v687, %v546
      %v706 = vsel %vm700, %v689, %v548
      %v708 = vsel %vm700, %v691, %v550
      %v710 = vsel %vm700, %v693, %v552
      %v712 = vsel %vm700, %v695, %v554
      %v714 = vsel %vm700, %v697, %v556
      %v716 = vsel %vm700, %v699, %v558
      %vm717 = vcmask 326656
      %v719 = vsel %vm717, %v702, %v563
      %v721 = vsel %vm717, %v704, %v565
      %v723 = vsel %vm717, %v706, %v567
      %v725 = vsel %vm717, %v708, %v569
      %v727 = vsel %vm717, %v710, %v571
      %v729 = vsel %vm717, %v712, %v573
      %v731 = vsel %vm717, %v714, %v575
      %v733 = vsel %vm717, %v716, %v577
      %vm734 = vcmask 392192
      %v736 = vsel %vm734, %v719, %v584
      %v738 = vsel %vm734, %v721, %v586
      %v740 = vsel %vm734, %v723, %v588
      %v742 = vsel %vm734, %v725, %v590
      %v744 = vsel %vm734, %v727, %v592
      %v746 = vsel %vm734, %v729, %v594
      %v748 = vsel %vm734, %v731, %v596
      %v750 = vsel %vm734, %v733, %v598
      %vm751 = vcmask 457728
      %v753 = vsel %vm751, %v736, %v615
      %v755 = vsel %vm751, %v738, %v617
      %v757 = vsel %vm751, %v740, %v619
      %v759 = vsel %vm751, %v742, %v621
      %v761 = vsel %vm751, %v744, %v623
      %v763 = vsel %vm751, %v746, %v625
      %v765 = vsel %vm751, %v748, %v627
      %v767 = vsel %vm751, %v750, %v629
      %vm768 = vcmask 523264
      %v770 = vsel %vm768, %v753, %v634
      %v772 = vsel %vm768, %v755, %v636
      %v774 = vsel %vm768, %v757, %v638
      %v776 = vsel %vm768, %v759, %v640
      %v778 = vsel %vm768, %v761, %v642
      %v780 = vsel %vm768, %v763, %v644
      %v782 = vsel %vm768, %v765, %v646
      %v784 = vsel %vm768, %v767, %v648
      %v785 = vld [vmem:[%s1] sm:$0xf]
      %v786 = vld [vmem:[%s1 + $0x4] sm:$0xf]
      %v787 = vld [vmem:[%s1 + $0x8] sm:$0xf]
      %v788 = vld [vmem:[%s1 + $0xc] sm:$0xf]
      %v789 = vld [vmem:[%s1 + $0x10] sm:$0xf]
      %v790 = vld [vmem:[%s1 + $0x14] sm:$0xf]
      %v791 = vld [vmem:[%s1 + $0x18] sm:$0xf]
      %v792 = vld [vmem:[%s1 + $0x1c] sm:$0xf]
      %v793 = vld [vmem:[%s1 + $0x20] sm:$0xf]
      %v794 = vld [vmem:[%s2] sm:$0x1]
      %v796 = vlaneseq
      %v797 = vshrl.u32 %v796, 7
      %v798 = vsub.s32 0, %v797
      %v799 = vrot.slane %v794, %v798
      %v810 = vunpack.c.l.b16 %v785
      %v811 = vunpack.c.l.b16 %v786
      %v812 = vunpack.c.l.b16 %v787
      %v813 = vunpack.c.l.b16 %v788
      %v814 = vunpack.c.l.b16 %v789
      %v815 = vunpack.c.l.b16 %v790
      %v816 = vunpack.c.l.b16 %v791
      %v817 = vunpack.c.l.b16 %v792
      %v818 = vunpack.c.l.b16 %v793
      %v819 = vpack.c.b16 %v811, %v810
      %v820 = vpack.c.b16 %v813, %v812
      %v821 = vpack.c.b16 %v815, %v814
      %v822 = vpack.c.b16 %v817, %v816
      %v823 = vpack.c.b16 %v818, %v818
      %vm828 = vcmask 588800
      %v829 = vsel %vm828, %v770, 0
      %v831 = vsel %vm828, %v772, 0
      %v833 = vsel %vm828, %v774, 0
      %v835 = vsel %vm828, %v776, 0
      %v837 = vsel %vm828, %v778, 0
      %v839 = vsel %vm828, %v780, 0
      %v841 = vsel %vm828, %v782, 0
      %v843 = vsel %vm828, %v784, 0
      %vm845 = vcmask 1043456
      %v847 = vsel %vm845, %v823, 0
      %849 = vmatprep.subr.bf16.mxu0 0
      %850 = vmatpush1.bf16.msra.mxu0 %v819
      %851 = vmatprep.subr.bf16.mxu0 0
      %852 = vmatpush1.bf16.msra.mxu0 %v820
      %853 = vmatprep.subr.bf16.mxu0 0
      %854 = vmatpush1.bf16.msra.mxu0 %v821
      %855 = vmatprep.subr.bf16.mxu0 0
      %856 = vmatpush1.bf16.msra.mxu0 %v822
      %857 = vmatprep.subr.bf16.mxu0 0
      %858 = vmatpush1.bf16.msra.mxu0 %v847
      %859 = vmatprep.subr.bf16.mxu0 0
      %860 = vmatpush1.bf16.msra.mxu0 0
      %861 = vmatprep.subr.bf16.mxu0 0
      %862 = vmatpush1.bf16.msra.mxu0 0
      %863 = vmatprep.subr.bf16.mxu0 0
      %864 = vmatpush1.bf16.msra.mxu0 0
      %865 = vmatprep.subr.bf16.mxu0 0
      %866 = vmatpush1.bf16.msra.mxu0 0
      %867 = vmatprep.subr.bf16.mxu0 0
      %868 = vmatpush1.bf16.msra.mxu0 0
      %869 = vmatprep.subr.bf16.mxu0 0
      %870 = vmatpush1.bf16.msra.mxu0 0
      %871 = vmatprep.subr.bf16.mxu0 0
      %872 = vmatpush1.bf16.msra.mxu0 0
      %873 = vmatprep.subr.bf16.mxu0 0
      %874 = vmatpush1.bf16.msra.mxu0 0
      %875 = vmatprep.subr.bf16.mxu0 0
      %876 = vmatpush1.bf16.msra.mxu0 0
      %877 = vmatprep.subr.bf16.mxu0 0
      %878 = vmatpush1.bf16.msra.mxu0 0
      %879 = vmatprep.subr.bf16.mxu0 0
      %880 = vmatpush1.bf16.msra.mxu0 0
      %881 = vmatprep.mubr.bf16.mxu0 0
      %882 = vmatmul.mubr.bf16.gmra.mrb[0].mxu0 %v829
      %v883 = vpop.f32.mrb[0].mxu0
      %v884 = vadd.f32 %v799, %v883
      %v885 = vpop.f32.mrb[0].mxu0
      %v886 = vpop.f32.mrb[0].mxu0
      %v887 = vadd.f32 %v799, %v886
      %v888 = vpop.f32.mrb[0].mxu0
      %889 = vmatprep.mubr.bf16.mxu0 0
      %890 = vmatmul.mubr.bf16.gmra.mrb[0].mxu0 %v831
      %v891 = vpop.f32.mrb[0].mxu0
      %v892 = vadd.f32 %v799, %v891
      %v893 = vpop.f32.mrb[0].mxu0
      %v894 = vpop.f32.mrb[0].mxu0
      %v895 = vadd.f32 %v799, %v894
      %v896 = vpop.f32.mrb[0].mxu0
      %897 = vmatprep.mubr.bf16.mxu0 0
      %898 = vmatmul.mubr.bf16.gmra.mrb[0].mxu0 %v833
      %v899 = vpop.f32.mrb[0].mxu0
      %v900 = vadd.f32 %v799, %v899
      %v901 = vpop.f32.mrb[0].mxu0
      %v902 = vpop.f32.mrb[0].mxu0
      %v903 = vadd.f32 %v799, %v902
      %v904 = vpop.f32.mrb[0].mxu0
      %905 = vmatprep.mubr.bf16.mxu0 0
      %906 = vmatmul.mubr.bf16.gmra.mrb[0].mxu0 %v835
      %v907 = vpop.f32.mrb[0].mxu0
      %v908 = vadd.f32 %v799, %v907
      %v909 = vpop.f32.mrb[0].mxu0
      %v910 = vpop.f32.mrb[0].mxu0
      %v911 = vadd.f32 %v799, %v910
      %v912 = vpop.f32.mrb[0].mxu0
      %913 = vmatprep.mubr.bf16.mxu0 0
      %914 = vmatmul.mubr.bf16.gmra.mrb[0].mxu0 %v837
      %v915 = vpop.f32.mrb[0].mxu0
      %v916 = vadd.f32 %v799, %v915
      %v917 = vpop.f32.mrb[0].mxu0
      %v918 = vpop.f32.mrb[0].mxu0
      %v919 = vadd.f32 %v799, %v918
      %v920 = vpop.f32.mrb[0].mxu0
      %921 = vmatprep.mubr.bf16.mxu0 0
      %922 = vmatmul.mubr.bf16.gmra.mrb[0].mxu0 %v839
      %v923 = vpop.f32.mrb[0].mxu0
      %v924 = vadd.f32 %v799, %v923
      %v925 = vpop.f32.mrb[0].mxu0
      %v926 = vpop.f32.mrb[0].mxu0
      %v927 = vadd.f32 %v799, %v926
      %v928 = vpop.f32.mrb[0].mxu0
      %929 = vmatprep.mubr.bf16.mxu0 0
      %930 = vmatmul.mubr.bf16.gmra.mrb[0].mxu0 %v841
      %v931 = vpop.f32.mrb[0].mxu0
      %v932 = vadd.f32 %v799, %v931
      %v933 = vpop.f32.mrb[0].mxu0
      %v934 = vpop.f32.mrb[0].mxu0
      %v935 = vadd.f32 %v799, %v934
      %v936 = vpop.f32.mrb[0].mxu0
      %937 = vmatprep.mubr.bf16.mxu0 0
      %938 = vmatmul.mubr.bf16.gmra.mrb[0].mxu0 %v843
      %v939 = vpop.f32.mrb[0].mxu0
      %v940 = vadd.f32 %v799, %v939
      %v941 = vpop.f32.mrb[0].mxu0
      %v942 = vpop.f32.mrb[0].mxu0
      %v943 = vadd.f32 %v799, %v942
      %v944 = vpop.f32.mrb[0].mxu0
      %945 = vdwg.mxu0
      %vm946 = vcmask 31744
      %947 = vst.msk [vmem:[%s248] sm:$0xff] %vm946, %v884
      %948 = vst.msk [vmem:[%s248 + $0x8] sm:$0xff] %vm946, %v887
      %949 = vst.msk [vmem:[%s248 + $0x10] sm:$0xff] %vm946, %v892
      %950 = vst.msk [vmem:[%s248 + $0x18] sm:$0xff] %vm946, %v895
      %951 = vst.msk [vmem:[%s248 + $0x20] sm:$0xff] %vm946, %v900
      %952 = vst.msk [vmem:[%s248 + $0x28] sm:$0xff] %vm946, %v903
      %953 = vst.msk [vmem:[%s248 + $0x30] sm:$0xff] %vm946, %v908
      %954 = vst.msk [vmem:[%s248 + $0x38] sm:$0xff] %vm946, %v911
      %955 = vst.msk [vmem:[%s248 + $0x40] sm:$0xff] %vm946, %v916
      %956 = vst.msk [vmem:[%s248 + $0x48] sm:$0xff] %vm946, %v919
      %957 = vst.msk [vmem:[%s248 + $0x50] sm:$0xff] %vm946, %v924
      %958 = vst.msk [vmem:[%s248 + $0x58] sm:$0xff] %vm946, %v927
      %959 = vst.msk [vmem:[%s248 + $0x60] sm:$0xff] %vm946, %v932
      %960 = vst.msk [vmem:[%s248 + $0x68] sm:$0xff] %vm946, %v935
      %961 = vst.msk [vmem:[%s248 + $0x70] sm:$0xff] %vm946, %v940
      %962 = vst.msk [vmem:[%s248 + $0x78] sm:$0xff] %vm946, %v943
      %v963 = vsel %vm946, %v884, 0.0
      %v964 = vsel %vm946, %v887, 0.0
      %v965 = vadd.f32 %v963, %v964
      %v966 = vsel %vm946, %v892, 0.0
      %v967 = vadd.f32 %v965, %v966
      %v968 = vsel %vm946, %v895, 0.0
      %v969 = vadd.f32 %v967, %v968
      %v970 = vsel %vm946, %v900, 0.0
      %v971 = vadd.f32 %v969, %v970
      %v972 = vsel %vm946, %v903, 0.0
      %v973 = vadd.f32 %v971, %v972
      %v974 = vsel %vm946, %v908, 0.0
      %v975 = vadd.f32 %v973, %v974
      %v976 = vsel %vm946, %v911, 0.0
      %v977 = vadd.f32 %v975, %v976
      %v978 = vsel %vm946, %v916, 0.0
      %v979 = vadd.f32 %v977, %v978
      %v980 = vsel %vm946, %v919, 0.0
      %v981 = vadd.f32 %v979, %v980
      %v982 = vsel %vm946, %v924, 0.0
      %v983 = vadd.f32 %v981, %v982
      %v984 = vsel %vm946, %v927, 0.0
      %v985 = vadd.f32 %v983, %v984
      %v986 = vsel %vm946, %v932, 0.0
      %v987 = vadd.f32 %v985, %v986
      %v988 = vsel %vm946, %v935, 0.0
      %v989 = vadd.f32 %v987, %v988
      %v990 = vsel %vm946, %v940, 0.0
      %v991 = vadd.f32 %v989, %v990
      %v992 = vsel %vm946, %v943, 0.0
      %v993 = vadd.f32 %v991, %v992
      %v994 = vrot.slane %v993, 4
      %v995 = vadd.f32 %v993, %v994
      %v996 = vrot.slane %v995, 2
      %v997 = vadd.f32 %v995, %v996
      %v998 = vrot.slane %v997, 1
      %v999 = vadd.f32 %v997, %v998
      %v1000 = vmul.f32 %v884, %v884
      %v1001 = vmul.f32 %v887, %v887
      %v1002 = vmul.f32 %v892, %v892
      %v1003 = vmul.f32 %v895, %v895
      %v1004 = vmul.f32 %v900, %v900
      %v1005 = vmul.f32 %v903, %v903
      %v1006 = vmul.f32 %v908, %v908
      %v1007 = vmul.f32 %v911, %v911
      %v1008 = vmul.f32 %v916, %v916
      %v1009 = vmul.f32 %v919, %v919
      %v1010 = vmul.f32 %v924, %v924
      %v1011 = vmul.f32 %v927, %v927
      %v1012 = vmul.f32 %v932, %v932
      %v1013 = vmul.f32 %v935, %v935
      %v1014 = vmul.f32 %v940, %v940
      %v1015 = vmul.f32 %v943, %v943
      %v1016 = vsel %vm946, %v1000, 0.0
      %v1017 = vsel %vm946, %v1001, 0.0
      %v1018 = vadd.f32 %v1016, %v1017
      %v1019 = vsel %vm946, %v1002, 0.0
      %v1020 = vadd.f32 %v1018, %v1019
      %v1021 = vsel %vm946, %v1003, 0.0
      %v1022 = vadd.f32 %v1020, %v1021
      %v1023 = vsel %vm946, %v1004, 0.0
      %v1024 = vadd.f32 %v1022, %v1023
      %v1025 = vsel %vm946, %v1005, 0.0
      %v1026 = vadd.f32 %v1024, %v1025
      %v1027 = vsel %vm946, %v1006, 0.0
      %v1028 = vadd.f32 %v1026, %v1027
      %v1029 = vsel %vm946, %v1007, 0.0
      %v1030 = vadd.f32 %v1028, %v1029
      %v1031 = vsel %vm946, %v1008, 0.0
      %v1032 = vadd.f32 %v1030, %v1031
      %v1033 = vsel %vm946, %v1009, 0.0
      %v1034 = vadd.f32 %v1032, %v1033
      %v1035 = vsel %vm946, %v1010, 0.0
      %v1036 = vadd.f32 %v1034, %v1035
      %v1037 = vsel %vm946, %v1011, 0.0
      %v1038 = vadd.f32 %v1036, %v1037
      %v1039 = vsel %vm946, %v1012, 0.0
      %v1040 = vadd.f32 %v1038, %v1039
      %v1041 = vsel %vm946, %v1013, 0.0
      %v1042 = vadd.f32 %v1040, %v1041
      %v1043 = vsel %vm946, %v1014, 0.0
      %v1044 = vadd.f32 %v1042, %v1043
      %v1045 = vsel %vm946, %v1015, 0.0
      %v1046 = vadd.f32 %v1044, %v1045
      %v1047 = vrot.slane %v1046, 4
      %v1048 = vadd.f32 %v1046, %v1047
      %v1049 = vrot.slane %v1048, 2
      %v1050 = vadd.f32 %v1048, %v1049
      %v1051 = vrot.slane %v1050, 1
      %v1052 = vadd.f32 %v1050, %v1051
      %vm1053 = vcmask 1040384
      %v1054 = vsel %vm1053, %v999, %v1052
      %vm1055 = vcmask 25600
      %1056 = vst.msk [vmem:[%s257] sm:$0x3] %vm1055, %v1054
      %s1057 = smul.u32 8, %s21
      %p1058 = scmp.lt.s32.totalorder %s20, 1
      %s1059 = scalar_select %p1058, %s20, 1
      %p1060 = scmp.lt.s32.totalorder %s1057, 15
      %s1061 = scalar_select %p1060, %s1057, 15
      %s1062 = smul.addr %s1061, 2
      %s1063 = smul.addr %s1059, 32
      %s1064 = sadd.s32 %s1062, %s1063
      %s1065 = smul.addr %s1064, 8
      %s1066 = scalar_lea.vmem %s3, %s1065
      %p1067 = scmp.lt.s32.totalorder %s20, 1
      %s1068 = scalar_select %p1067, %s20, 1
      %p1069 = scmp.lt.s32.totalorder %s21, 1
      %s1070 = scalar_select %p1069, %s21, 1
      %s1071 = smul.addr %s1068, 2
      %s1072 = sadd.s32 %s1070, %s1071
      %s1073 = smul.addr %s1072, 2
      %s1074 = scalar_lea.vmem %s4, %s1073
      // Predicated region
      $region33: #{ao_forward.3} parent=31 // pred_check
        %p1075 = pneg %p118
      $region34: #{ao_forward.3} parent=31 // pred_check_branch
        %1077 = sbr.rel (%p1075) target = $region36
      $region35: #{ao_forward.3} parent=31 // pred_region
        %s1078 = smul.u32 8, %s21
      $region36: #{ao_forward.3} parent=31 // pred_fallthru
        _
      // Predicated region
      $region37: #{ao_forward.3} parent=31 // pred_check
        %p1079 = pneg %p146
      $region38: #{ao_forward.3} parent=31 // pred_check_branch
        %1081 = sbr.rel (%p1079) target = $region40
      $region39: #{ao_forward.3} parent=31 // pred_region
        _
      $region40: #{ao_forward.3} parent=31 // pred_fallthru
        _
    $region32: #{ao_forward.3} parent=5 // pred_fallthru
      _
    %p1082 = scmp.le.s32.totalorder 2, %s11
    // Predicated region
    $region41: #{ao_forward.3} parent=5 // pred_check
      %p1083 = pneg %p1082
    $region42: #{ao_forward.3} parent=5 // pred_check_branch
      %1085 = sbr.rel (%p1083) target = $region44
    $region43: #{ao_forward.3} parent=5 // pred_region
      %s1086 = ssub.s32 %s11, 2
      // Predicated region
      $region45: #{ao_forward.3} parent=43 // pred_check
        %p1087 = pneg %p124
      $region46: #{ao_forward.3} parent=43 // pred_check_branch
        %1089 = sbr.rel (%p1087) target = $region48
      $region47: #{ao_forward.3} parent=43 // pred_region
        %s1090 = smul.u32 8, %s23
        %p1091 = scmp.lt.s32.totalorder %s22, 1
        %s1092 = scalar_select %p1091, %s22, 1
        %p1093 = scmp.lt.s32.totalorder %s1090, 15
        %s1094 = scalar_select %p1093, %s1090, 15
        %s1095 = smul.addr %s1094, 2
        %s1096 = smul.addr %s1092, 32
        %s1097 = sadd.s32 %s1095, %s1096
        %s1098 = smul.addr %s1097, 8
        %s1099 = scalar_lea.vmem %s3, %s1098
      $region48: #{ao_forward.3} parent=43 // pred_fallthru
        _
      // Predicated region
      $region49: #{ao_forward.3} parent=43 // pred_check
        %p1100 = pneg %p152
      $region50: #{ao_forward.3} parent=43 // pred_check_branch
        %1102 = sbr.rel (%p1100) target = $region52
      $region51: #{ao_forward.3} parent=43 // pred_region
        %p1103 = scmp.lt.s32.totalorder %s22, 1
        %s1104 = scalar_select %p1103, %s22, 1
        %p1105 = scmp.lt.s32.totalorder %s23, 1
        %s1106 = scalar_select %p1105, %s23, 1
        %s1107 = smul.addr %s1104, 2
        %s1108 = sadd.s32 %s1106, %s1107
        %s1109 = smul.addr %s1108, 2
        %s1110 = scalar_lea.vmem %s4, %s1109
      $region52: #{ao_forward.3} parent=43 // pred_fallthru
        _
    $region44: #{ao_forward.3} parent=5 // pred_fallthru
      _
  $region6: #{ao_forward.3} parent=0 // loop_footer
    %s15 = sadd.s32 1, %s11
  $region7: #{ao_forward.3} parent=0 // loop_footer_branch
    %10 = sbr.rel target = $region3
  $region8: #{ao_forward.3} parent=0 // loop_exit
    _

// kernel: ao_forward.4
$region0: #{ao_forward.4}
  #allocation0 [shape = 'u32[]', space=smem, size = 0x4, offset = 0x4, fixed_abs, tag = 'smem constant byte address 0x4 - core index']
  #allocation1 [shape = 'u32[144,128]{1,0:T(1,128)}', space=vmem, size = 0x12000, scoped, tag = 'internal scratch']
  %s0 = inlined_call_operand.vmem [shape: f32[2,2,2,4], index: 0, kind: input, shape index: {}]
  %s1 = inlined_call_operand.vmem [shape: f32[2,2,10,18,4], index: 1, kind: input, shape index: {}]
  %s2 = inlined_call_operand.vmem [shape: bf16[36,4], index: 2, kind: input, shape index: {}]
  %s3 = inlined_call_operand.vmem [shape: f32[1,4], index: 3, kind: input, shape index: {}]
  %s4 = inlined_call_operand.vmem [shape: f32[1,4], index: 4, kind: input, shape index: {}]
  %s5 = inlined_call_operand.vmem [shape: f32[1,4], index: 5, kind: input, shape index: {}]
  %s6 = inlined_call_operand.vmem [shape: f32[2,16,16,4], index: 6, kind: output, shape index: {}]
  %s7 = sld [smem:[#allocation0]]
  $region57: #{ao_forward.4} parent=0
    _
  %s9 = ssub.s32 1, %s7
  %s10 = scalar_select 0, %s9, %s7
  loop: start=0, step=1, limit=6
  $region2: #{ao_forward.4} parent=0 // loop_pre_header
    _
  $region3: #{ao_forward.4} parent=0 // loop_header
    %s12 = sphi 0, %s16
    %p13 = scmp.ge.s32.totalorder %s12, 6
    %s19 = sphi 0, %s31
    %s20 = sphi 0, %s27
    %s21 = sphi 0, %s19
    %s22 = sphi 0, %s20
    %s23 = sphi 0, %s21
    %s24 = sphi 0, %s22
    %s32 = sphi 0, %s32
    %s34 = sphi 0, %s32
    %s35 = sphi 0, %s34
    %s49 = sphi 0, %s35
    %s57 = sphi 0, %s59
    %s60 = sphi 0, %s57
    %s61 = sphi 0, %s60
    %s77 = sphi 0, %s61
    %s81 = sphi 0, %s81
    %s83 = sphi 0, %s81
    %s84 = sphi 0, %s83
    %s98 = sphi 0, %s84
    %s102 = sphi 0, %s102
    %s104 = sphi 0, %s102
    %s105 = sphi 0, %s104
    %s119 = sphi 0, %s105
    %s123 = sphi 0, %s123
    %s125 = sphi 0, %s123
    %s126 = sphi 0, %s125
    %s140 = sphi 0, %s126
    %s144 = sphi 0, %s144
    %s146 = sphi 0, %s144
    %s147 = sphi 0, %s146
    %s161 = sphi 0, %s147
    %s169 = sphi 0, %s171
    %s172 = sphi 0, %s169
    %s173 = sphi 0, %s172
    %s189 = sphi 0, %s173
  $region4: #{ao_forward.4} parent=0 // loop_header_branch
    %15 = sbr.rel (%p13) target = $region8
  $region5: #{ao_forward.4} parent=0 // loop_body
    %s17 = ssub.s32 %s12, 1
    %s18 = ssub.s32 %s12, 2
    %s25 = sadd.s32 1, %s20
    %p26 = scmp.ge.s32.totalorder %s25, 2
    %s27 = scalar_select %p26, 0, %s25
    %s28 = sadd.s32 1, %s19
    %s29 = scalar_select %p26, %s28, %s19
    %p30 = scmp.ge.s32.totalorder %s29, 2
    %s31 = scalar_select %p30, 0, %s29
    %s33 = sadd.s32 %s32, 1
    %p36 = scmp.eq.s32.totalorder %s12, 3
    %p37 = scmp.ne.s32.totalorder %s32, %s34
    %p38 = scmp.eq.s32.totalorder %s12, 0
    %p39 = por %p37, %p38
    %p40 = scmp.ne.s32.totalorder %s32, %s34
    %p41 = scmp.eq.s32.totalorder %s17, 3
    %p42 = por %p40, %p41
    %p43 = scmp.ne.s32.totalorder %s34, %s35
    %p44 = scmp.eq.s32.totalorder %s17, 0
    %p45 = por %p43, %p44
    %p46 = scmp.ne.s32.totalorder %s34, %s35
    %p47 = scmp.eq.s32.totalorder %s18, 3
    %p48 = por %p46, %p47
    %p50 = scmp.ne.s32.totalorder %s35, %s49
    %p51 = scmp.eq.s32.totalorder %s18, 0
    %p52 = por %p50, %p51
    %s53 = ssub.s32 %s19, %s31
    %s54 = ssub.s32 %s20, %s27
    %s55 = sor.u32 %s53, %s54
    %p56 = scmp.eq.s32.totalorder %s55, 0
    %s58 = sadd.s32 %s57, 1
    %s59 = scalar_select %p56, %s57, %s58
    %p62 = pneg %p56
    %p63 = scmp.eq.s32.totalorder %s12, 3
    %p64 = por %p62, %p63
    %p65 = scmp.ne.s32.totalorder %s57, %s60
    %p66 = scmp.eq.s32.totalorder %s12, 0
    %p67 = por %p65, %p66
    %p68 = scmp.ne.s32.totalorder %s57, %s60
    %p69 = scmp.eq.s32.totalorder %s17, 3
    %p70 = por %p68, %p69
    %p71 = scmp.ne.s32.totalorder %s60, %s61
    %p72 = scmp.eq.s32.totalorder %s17, 0
    %p73 = por %p71, %p72
    %p74 = scmp.ne.s32.totalorder %s60, %s61
    %p75 = scmp.eq.s32.totalorder %s18, 3
    %p76 = por %p74, %p75
    %p78 = scmp.ne.s32.totalorder %s61, %s77
    %p79 = scmp.eq.s32.totalorder %s18, 0
    %p80 = por %p78, %p79
    %s82 = sadd.s32 %s81, 1
    %p85 = scmp.eq.s32.totalorder %s12, 3
    %p86 = scmp.ne.s32.totalorder %s81, %s83
    %p87 = scmp.eq.s32.totalorder %s12, 0
    %p88 = por %p86, %p87
    %p89 = scmp.ne.s32.totalorder %s81, %s83
    %p90 = scmp.eq.s32.totalorder %s17, 3
    %p91 = por %p89, %p90
    %p92 = scmp.ne.s32.totalorder %s83, %s84
    %p93 = scmp.eq.s32.totalorder %s17, 0
    %p94 = por %p92, %p93
    %p95 = scmp.ne.s32.totalorder %s83, %s84
    %p96 = scmp.eq.s32.totalorder %s18, 3
    %p97 = por %p95, %p96
    %p99 = scmp.ne.s32.totalorder %s84, %s98
    %p100 = scmp.eq.s32.totalorder %s18, 0
    %p101 = por %p99, %p100
    %s103 = sadd.s32 %s102, 1
    %p106 = scmp.eq.s32.totalorder %s12, 3
    %p107 = scmp.ne.s32.totalorder %s102, %s104
    %p108 = scmp.eq.s32.totalorder %s12, 0
    %p109 = por %p107, %p108
    %p110 = scmp.ne.s32.totalorder %s102, %s104
    %p111 = scmp.eq.s32.totalorder %s17, 3
    %p112 = por %p110, %p111
    %p113 = scmp.ne.s32.totalorder %s104, %s105
    %p114 = scmp.eq.s32.totalorder %s17, 0
    %p115 = por %p113, %p114
    %p116 = scmp.ne.s32.totalorder %s104, %s105
    %p117 = scmp.eq.s32.totalorder %s18, 3
    %p118 = por %p116, %p117
    %p120 = scmp.ne.s32.totalorder %s105, %s119
    %p121 = scmp.eq.s32.totalorder %s18, 0
    %p122 = por %p120, %p121
    %s124 = sadd.s32 %s123, 1
    %p127 = scmp.eq.s32.totalorder %s12, 3
    %p128 = scmp.ne.s32.totalorder %s123, %s125
    %p129 = scmp.eq.s32.totalorder %s12, 0
    %p130 = por %p128, %p129
    %p131 = scmp.ne.s32.totalorder %s123, %s125
    %p132 = scmp.eq.s32.totalorder %s17, 3
    %p133 = por %p131, %p132
    %p134 = scmp.ne.s32.totalorder %s125, %s126
    %p135 = scmp.eq.s32.totalorder %s17, 0
    %p136 = por %p134, %p135
    %p137 = scmp.ne.s32.totalorder %s125, %s126
    %p138 = scmp.eq.s32.totalorder %s18, 3
    %p139 = por %p137, %p138
    %p141 = scmp.ne.s32.totalorder %s126, %s140
    %p142 = scmp.eq.s32.totalorder %s18, 0
    %p143 = por %p141, %p142
    %s145 = sadd.s32 %s144, 1
    %p148 = scmp.eq.s32.totalorder %s12, 3
    %p149 = scmp.ne.s32.totalorder %s144, %s146
    %p150 = scmp.eq.s32.totalorder %s12, 0
    %p151 = por %p149, %p150
    %p152 = scmp.ne.s32.totalorder %s144, %s146
    %p153 = scmp.eq.s32.totalorder %s17, 3
    %p154 = por %p152, %p153
    %p155 = scmp.ne.s32.totalorder %s146, %s147
    %p156 = scmp.eq.s32.totalorder %s17, 0
    %p157 = por %p155, %p156
    %p158 = scmp.ne.s32.totalorder %s146, %s147
    %p159 = scmp.eq.s32.totalorder %s18, 3
    %p160 = por %p158, %p159
    %p162 = scmp.ne.s32.totalorder %s147, %s161
    %p163 = scmp.eq.s32.totalorder %s18, 0
    %p164 = por %p162, %p163
    %s165 = ssub.s32 %s19, %s31
    %s166 = ssub.s32 %s20, %s27
    %s167 = sor.u32 %s165, %s166
    %p168 = scmp.eq.s32.totalorder %s167, 0
    %s170 = sadd.s32 %s169, 1
    %s171 = scalar_select %p168, %s169, %s170
    %p174 = pneg %p168
    %p175 = scmp.eq.s32.totalorder %s12, 3
    %p176 = por %p174, %p175
    %p177 = scmp.ne.s32.totalorder %s169, %s172
    %p178 = scmp.eq.s32.totalorder %s12, 0
    %p179 = por %p177, %p178
    %p180 = scmp.ne.s32.totalorder %s169, %s172
    %p181 = scmp.eq.s32.totalorder %s17, 3
    %p182 = por %p180, %p181
    %p183 = scmp.ne.s32.totalorder %s172, %s173
    %p184 = scmp.eq.s32.totalorder %s17, 0
    %p185 = por %p183, %p184
    %p186 = scmp.ne.s32.totalorder %s172, %s173
    %p187 = scmp.eq.s32.totalorder %s18, 3
    %p188 = por %p186, %p187
    %p190 = scmp.ne.s32.totalorder %s173, %s189
    %p191 = scmp.eq.s32.totalorder %s18, 0
    %p192 = por %p190, %p191
    %p193 = scmp.le.s32.totalorder 1, %s12
    %p194 = scmp.lt.s32.totalorder %s12, 5
    %p195 = pnand %p193, %p194
    %p196 = pneg %p195
    // Predicated region
    $region9: #{ao_forward.4} parent=5 // pred_check
      _
    $region10: #{ao_forward.4} parent=5 // pred_check_branch
      %198 = sbr.rel (%p195) target = $region12
    $region11: #{ao_forward.4} parent=5 // pred_region
      %s199 = ssub.s32 %s12, 1
      // Predicated region
      $region13: #{ao_forward.4} parent=11 // pred_check
        %p200 = pneg %p45
      $region14: #{ao_forward.4} parent=11 // pred_check_branch
        %202 = sbr.rel (%p200) target = $region16
      $region15: #{ao_forward.4} parent=11 // pred_region
        _
      $region16: #{ao_forward.4} parent=11 // pred_fallthru
        _
      // Predicated region
      $region17: #{ao_forward.4} parent=11 // pred_check
        %p203 = pneg %p94
      $region18: #{ao_forward.4} parent=11 // pred_check_branch
        %205 = sbr.rel (%p203) target = $region20
      $region19: #{ao_forward.4} parent=11 // pred_region
        _
      $region20: #{ao_forward.4} parent=11 // pred_fallthru
        _
      // Predicated region
      $region21: #{ao_forward.4} parent=11 // pred_check
        %p206 = pneg %p115
      $region22: #{ao_forward.4} parent=11 // pred_check_branch
        %208 = sbr.rel (%p206) target = $region24
      $region23: #{ao_forward.4} parent=11 // pred_region
        _
      $region24: #{ao_forward.4} parent=11 // pred_fallthru
        _
      // Predicated region
      $region25: #{ao_forward.4} parent=11 // pred_check
        %p209 = pneg %p136
      $region26: #{ao_forward.4} parent=11 // pred_check_branch
        %211 = sbr.rel (%p209) target = $region28
      $region27: #{ao_forward.4} parent=11 // pred_region
        _
      $region28: #{ao_forward.4} parent=11 // pred_fallthru
        _
      // Predicated region
      $region29: #{ao_forward.4} parent=11 // pred_check
        %p212 = pneg %p157
      $region30: #{ao_forward.4} parent=11 // pred_check_branch
        %214 = sbr.rel (%p212) target = $region32
      $region31: #{ao_forward.4} parent=11 // pred_region
        _
      $region32: #{ao_forward.4} parent=11 // pred_fallthru
        _
    $region12: #{ao_forward.4} parent=5 // pred_fallthru
      _
    %p215 = scmp.lt.s32.totalorder %s12, 4
    // Predicated region
    $region33: #{ao_forward.4} parent=5 // pred_check
      %p216 = pneg %p215
    $region34: #{ao_forward.4} parent=5 // pred_check_branch
      %218 = sbr.rel (%p216) target = $region36
    $region35: #{ao_forward.4} parent=5 // pred_region
      // Predicated region
      $region37: #{ao_forward.4} parent=35 // pred_check
        %p219 = pneg %p67
      $region38: #{ao_forward.4} parent=35 // pred_check_branch
        %221 = sbr.rel (%p219) target = $region40
      $region39: #{ao_forward.4} parent=35 // pred_region
        %p222 = scmp.lt.s32.totalorder %s19, 1
        %s223 = scalar_select %p222, %s19, 1
        %p224 = scmp.lt.s32.totalorder %s20, 1
        %s225 = scalar_select %p224, %s20, 1
        %s226 = smul.addr %s225, 30
        %s227 = smul.addr %s223, 60
        %s228 = sadd.s32 %s226, %s227
        %s229 = smul.addr %s228, 8
        %s230 = scalar_lea.vmem %s1, %s229
      $region40: #{ao_forward.4} parent=35 // pred_fallthru
        _
    $region36: #{ao_forward.4} parent=5 // pred_fallthru
      _
    %p231 = scmp.le.s32.totalorder 1, %s12
    %p232 = scmp.lt.s32.totalorder %s12, 5
    %p233 = pnand %p231, %p232
    %p234 = pneg %p233
    // Predicated region
    $region41: #{ao_forward.4} parent=5 // pred_check
      _
    $region42: #{ao_forward.4} parent=5 // pred_check_branch
      %236 = sbr.rel (%p233) target = $region44
    $region43: #{ao_forward.4} parent=5 // pred_region
      %s237 = ssub.s32 %s12, 1
      %p238 = pneg %p45
      %p239 = pneg %p42
      %p240 = scmp.lt.s32.totalorder %s21, 1
      %s241 = scalar_select %p240, %s21, 1
      %p242 = scmp.lt.s32.totalorder %s22, 1
      %s243 = scalar_select %p242, %s22, 1
      %s244 = smul.addr %s243, 30
      %s245 = smul.addr %s241, 60
      %s246 = sadd.s32 %s244, %s245
      %s247 = smul.addr %s246, 8
      %s248 = scalar_lea.vmem %s1, %s247
      %p249 = pneg %p73
      %p250 = pneg %p70
      %p251 = pneg %p94
      %p252 = pneg %p91
      %p253 = pneg %p115
      %p254 = pneg %p112
      %p255 = pneg %p136
      %p256 = pneg %p133
      %p257 = pneg %p157
      %p258 = pneg %p154
      %p259 = pneg %p185
      %p260 = pneg %p182
      %s261 = smul.u32 8, %s22
      %p262 = scmp.lt.s32.totalorder %s21, 1
      %s263 = scalar_select %p262, %s21, 1
      %p264 = scmp.lt.s32.totalorder %s261, 15
      %s265 = scalar_select %p264, %s261, 15
      %s266 = smul.addr %s265, 2
      %s267 = smul.addr %s263, 32
      %s268 = sadd.s32 %s266, %s267
      %s269 = smul.addr %s268, 8
      %s270 = scalar_lea.vmem %s6, %s269
      %p271 = scmp.lt.s32.totalorder %s21, 1
      %s272 = scalar_select %p271, %s21, 1
      %p273 = scmp.lt.s32.totalorder %s22, 1
      %s274 = scalar_select %p273, %s22, 1
      %s275 = smul.addr %s274, 30
      %s276 = smul.addr %s272, 60
      %s277 = sadd.s32 %s275, %s276
      %s278 = smul.addr %s277, 8
      %s279 = scalar_lea.vmem %s1, %s278
      %s280 = smul.u32 8, %s22
      %p281 = scmp.lt.s32.totalorder %s21, 1
      %s282 = scalar_select %p281, %s21, 1
      %p283 = scmp.lt.s32.totalorder %s280, 15
      %s284 = scalar_select %p283, %s280, 15
      %s285 = smul.addr %s284, 2
      %s286 = smul.addr %s282, 32
      %s287 = sadd.s32 %s285, %s286
      %s288 = smul.addr %s287, 8
      %s289 = scalar_lea.vmem %s6, %s288
      %s290 = smul.u32 8, %s22
      %v292 = vld [vmem:[%s0] sm:$0x3]
      %v293 = vld [vmem:[%s0 + $0x2] sm:$0x3]
      %v294 = vld [vmem:[%s0 + $0x4] sm:$0x3]
      %v295 = vld [vmem:[%s0 + $0x6] sm:$0x3]
      %vm296 = vcmask 25600
      %v297 = vsel %vm296, %v292, 0.0
      %v298 = vsel %vm296, %v293, 0.0
      %v299 = vadd.f32 %v297, %v298
      %v300 = vsel %vm296, %v294, 0.0
      %v301 = vadd.f32 %v299, %v300
      %v302 = vsel %vm296, %v295, 0.0
      %v303 = vadd.f32 %v301, %v302
      %v304 = vrcp.pop 512.0
      %v305 = vmul.f32 %v303, %v304
      %v306 = vmul.f32 %v305, %v305
      %v308 = vrot.slane %v306, 7
      %v310 = vsub.f32 %v305, %v308
      %v311 = vadd.f32 %v310, 1e-05
      %v312 = vrsqrt.pop %v311
      %v313 = vld [vmem:[%s4] sm:$0x1]
      %v316 = vunpack.c.l.s4 1966171168
      %v317 = vunpack.c.0.s8 %v316
      %v318 = vlaneseq
      %v319 = vshrl.u32 %v318, 7
      %v320 = vsub.s32 %v317, %v319
      %v321 = vrot.slane %v312, %v320
      %v322 = vcombine.high %v321, %v321
      %v324 = vunpack.c.l.s4 1966171168
      %v325 = vunpack.c.0.s8 %v324
      %v326 = vlaneseq
      %v327 = vshrl.u32 %v326, 7
      %v328 = vsub.s32 %v325, %v327
      %v329 = vrot.slane %v322, %v328
      %v331 = vmul.f32 %v313, %v329
      %v332 = vld [vmem:[%s5] sm:$0x1]
      %v333 = vmul.f32 %v305, %v313
      %v334 = vrot.slane %v312, 1
      %v336 = vmul.f32 %v333, %v334
      %v337 = vsub.f32 %v332, %v336
      %v338 = vld [vmem:[%s279] sm:$0xff]
      %v339 = vld [vmem:[%s279 + $0x8] sm:$0xff]
      %v340 = vld [vmem:[%s279 + $0x10] sm:$0x3]
      %v341 = vld [vmem:[%s279 + $0x18] sm:$0xff]
      %v342 = vld [vmem:[%s279 + $0x20] sm:$0xff]
      %v343 = vld [vmem:[%s279 + $0x28] sm:$0x3]
      %v344 = vld [vmem:[%s279 + $0x30] sm:$0xff]
      %v345 = vld [vmem:[%s279 + $0x38] sm:$0xff]
      %v346 = vld [vmem:[%s279 + $0x40] sm:$0x3]
      %v347 = vld [vmem:[%s279 + $0x48] sm:$0xff]
      %v348 = vld [vmem:[%s279 + $0x50] sm:$0xff]
      %v349 = vld [vmem:[%s279 + $0x58] sm:$0x3]
      %v350 = vld [vmem:[%s279 + $0x60] sm:$0xff]
      %v351 = vld [vmem:[%s279 + $0x68] sm:$0xff]
      %v352 = vld [vmem:[%s279 + $0x70] sm:$0x3]
      %v353 = vld [vmem:[%s279 + $0x78] sm:$0xff]
      %v354 = vld [vmem:[%s279 + $0x80] sm:$0xff]
      %v355 = vld [vmem:[%s279 + $0x88] sm:$0x3]
      %v356 = vld [vmem:[%s279 + $0x90] sm:$0xff]
      %v357 = vld [vmem:[%s279 + $0x98] sm:$0xff]
      %v358 = vld [vmem:[%s279 + $0xa0] sm:$0x3]
      %v359 = vld [vmem:[%s279 + $0xa8] sm:$0xff]
      %v360 = vld [vmem:[%s279 + $0xb0] sm:$0xff]
      %v361 = vld [vmem:[%s279 + $0xb8] sm:$0x3]
      %v362 = vld [vmem:[%s279 + $0xc0] sm:$0xff]
      %v363 = vld [vmem:[%s279 + $0xc8] sm:$0xff]
      %v364 = vld [vmem:[%s279 + $0xd0] sm:$0x3]
      %v365 = vld [vmem:[%s279 + $0xd8] sm:$0xff]
      %v366 = vld [vmem:[%s279 + $0xe0] sm:$0xff]
      %v367 = vld [vmem:[%s279 + $0xe8] sm:$0x3]
      %v369 = vlaneseq
      %v370 = vshrl.u32 %v369, 7
      %v371 = vsub.s32 0, %v370
      %v372 = vrot.slane %v331, %v371
      %v374 = vmul.f32 %v338, %v372
      %v375 = vmul.f32 %v339, %v372
      %v376 = vmul.f32 %v340, %v372
      %v377 = vmul.f32 %v341, %v372
      %v378 = vmul.f32 %v342, %v372
      %v379 = vmul.f32 %v343, %v372
      %v380 = vmul.f32 %v344, %v372
      %v381 = vmul.f32 %v345, %v372
      %v382 = vmul.f32 %v346, %v372
      %v383 = vmul.f32 %v347, %v372
      %v384 = vmul.f32 %v348, %v372
      %v385 = vmul.f32 %v349, %v372
      %v386 = vmul.f32 %v350, %v372
      %v387 = vmul.f32 %v351, %v372
      %v388 = vmul.f32 %v352, %v372
      %v389 = vmul.f32 %v353, %v372
      %v390 = vmul.f32 %v354, %v372
      %v391 = vmul.f32 %v355, %v372
      %v392 = vmul.f32 %v356, %v372
      %v393 = vmul.f32 %v357, %v372
      %v394 = vmul.f32 %v358, %v372
      %v395 = vmul.f32 %v359, %v372
      %v396 = vmul.f32 %v360, %v372
      %v397 = vmul.f32 %v361, %v372
      %v398 = vmul.f32 %v362, %v372
      %v399 = vmul.f32 %v363, %v372
      %v400 = vmul.f32 %v364, %v372
      %v401 = vmul.f32 %v365, %v372
      %v402 = vmul.f32 %v366, %v372
      %v403 = vmul.f32 %v367, %v372
      %v405 = vlaneseq
      %v406 = vshrl.u32 %v405, 7
      %v407 = vsub.s32 0, %v406
      %v408 = vrot.slane %v337, %v407
      %v410 = vadd.f32 %v374, %v408
      %v411 = vadd.f32 %v375, %v408
      %v412 = vadd.f32 %v376, %v408
      %v413 = vadd.f32 %v377, %v408
      %v414 = vadd.f32 %v378, %v408
      %v415 = vadd.f32 %v379, %v408
      %v416 = vadd.f32 %v380, %v408
      %v417 = vadd.f32 %v381, %v408
      %v418 = vadd.f32 %v382, %v408
      %v419 = vadd.f32 %v383, %v408
      %v420 = vadd.f32 %v384, %v408
      %v421 = vadd.f32 %v385, %v408
      %v422 = vadd.f32 %v386, %v408
      %v423 = vadd.f32 %v387, %v408
      %v424 = vadd.f32 %v388, %v408
      %v425 = vadd.f32 %v389, %v408
      %v426 = vadd.f32 %v390, %v408
      %v427 = vadd.f32 %v391, %v408
      %v428 = vadd.f32 %v392, %v408
      %v429 = vadd.f32 %v393, %v408
      %v430 = vadd.f32 %v394, %v408
      %v431 = vadd.f32 %v395, %v408
      %v432 = vadd.f32 %v396, %v408
      %v433 = vadd.f32 %v397, %v408
      %v434 = vadd.f32 %v398, %v408
      %v435 = vadd.f32 %v399, %v408
      %v436 = vadd.f32 %v400, %v408
      %v437 = vadd.f32 %v401, %v408
      %v438 = vadd.f32 %v402, %v408
      %v439 = vadd.f32 %v403, %v408
      %v440 = vmax.f32 %v410, 0.0
      %v441 = vmax.f32 %v411, 0.0
      %v442 = vmax.f32 %v412, 0.0
      %v443 = vmax.f32 %v413, 0.0
      %v444 = vmax.f32 %v414, 0.0
      %v445 = vmax.f32 %v415, 0.0
      %v446 = vmax.f32 %v416, 0.0
      %v447 = vmax.f32 %v417, 0.0
      %v448 = vmax.f32 %v418, 0.0
      %v449 = vmax.f32 %v419, 0.0
      %v450 = vmax.f32 %v420, 0.0
      %v451 = vmax.f32 %v421, 0.0
      %v452 = vmax.f32 %v422, 0.0
      %v453 = vmax.f32 %v423, 0.0
      %v454 = vmax.f32 %v424, 0.0
      %v455 = vmax.f32 %v425, 0.0
      %v456 = vmax.f32 %v426, 0.0
      %v457 = vmax.f32 %v427, 0.0
      %v458 = vmax.f32 %v428, 0.0
      %v459 = vmax.f32 %v429, 0.0
      %v460 = vmax.f32 %v430, 0.0
      %v461 = vmax.f32 %v431, 0.0
      %v462 = vmax.f32 %v432, 0.0
      %v463 = vmax.f32 %v433, 0.0
      %v464 = vmax.f32 %v434, 0.0
      %v465 = vmax.f32 %v435, 0.0
      %v466 = vmax.f32 %v436, 0.0
      %v467 = vmax.f32 %v437, 0.0
      %v468 = vmax.f32 %v438, 0.0
      %v469 = vmax.f32 %v439, 0.0
      %v470 = vpack.c.bf16 %v441, %v440
      %v471 = vpack.c.bf16 %v442, %v442
      %v472 = vpack.c.bf16 %v444, %v443
      %v473 = vpack.c.bf16 %v445, %v445
      %v474 = vpack.c.bf16 %v447, %v446
      %v475 = vpack.c.bf16 %v448, %v448
      %v476 = vpack.c.bf16 %v450, %v449
      %v477 = vpack.c.bf16 %v451, %v451
      %v478 = vpack.c.bf16 %v453, %v452
      %v479 = vpack.c.bf16 %v454, %v454
      %v480 = vpack.c.bf16 %v456, %v455
      %v481 = vpack.c.bf16 %v457, %v457
      %v482 = vpack.c.bf16 %v459, %v458
      %v483 = vpack.c.bf16 %v460, %v460
      %v484 = vpack.c.bf16 %v462, %v461
      %v485 = vpack.c.bf16 %v463, %v463
      %v486 = vpack.c.bf16 %v465, %v464
      %v487 = vpack.c.bf16 %v466, %v466
      %v488 = vpack.c.bf16 %v468, %v467
      %v489 = vpack.c.bf16 %v469, %v469
      %vm490 = vsmask.f32 7424
      %v492 = vshrl.u32 %v470, 16
      %v494 = vshll.u32 %v470, 16
      %v496 = vrot.slane %v494, 1
      %v497 = vor.u32 %v492, %v496
      %v499 = vshll.u32 %v471, 16
      %v501 = vrot.slane %v499, 1
      %v502 = vsel %vm490, %v497, %v501
      %v504 = vshrl.u32 %v472, 16
      %v506 = vshll.u32 %v472, 16
      %v508 = vrot.slane %v506, 1
      %v509 = vor.u32 %v504, %v508
      %v511 = vshll.u32 %v473, 16
      %v513 = vrot.slane %v511, 1
      %v514 = vsel %vm490, %v509, %v513
      %v516 = vshrl.u32 %v474, 16
      %v518 = vshll.u32 %v474, 16
      %v520 = vrot.slane %v518, 1
      %v521 = vor.u32 %v516, %v520
      %v523 = vshll.u32 %v475, 16
      %v525 = vrot.slane %v523, 1
      %v526 = vsel %vm490, %v521, %v525
      %v528 = vshrl.u32 %v476, 16
      %v530 = vshll.u32 %v476, 16
      %v532 = vrot.slane %v530, 1
      %v533 = vor.u32 %v528, %v532
      %v535 = vshll.u32 %v477, 16
      %v537 = vrot.slane %v535, 1
      %v538 = vsel %vm490, %v533, %v537
      %v540 = vshrl.u32 %v478, 16
      %v542 = vshll.u32 %v478, 16
      %v544 = vrot.slane %v542, 1
      %v545 = vor.u32 %v540, %v544
      %v547 = vshll.u32 %v479, 16
      %v549 = vrot.slane %v547, 1
      %v550 = vsel %vm490, %v545, %v549
      %v552 = vshrl.u32 %v480, 16
      %v554 = vshll.u32 %v480, 16
      %v556 = vrot.slane %v554, 1
      %v557 = vor.u32 %v552, %v556
      %v559 = vshll.u32 %v481, 16
      %v561 = vrot.slane %v559, 1
      %v562 = vsel %vm490, %v557, %v561
      %v564 = vshrl.u32 %v482, 16
      %v566 = vshll.u32 %v482, 16
      %v568 = vrot.slane %v566, 1
      %v569 = vor.u32 %v564, %v568
      %v571 = vshll.u32 %v483, 16
      %v573 = vrot.slane %v571, 1
      %v574 = vsel %vm490, %v569, %v573
      %v576 = vshrl.u32 %v484, 16
      %v578 = vshll.u32 %v484, 16
      %v580 = vrot.slane %v578, 1
      %v581 = vor.u32 %v576, %v580
      %v583 = vshll.u32 %v485, 16
      %v585 = vrot.slane %v583, 1
      %v586 = vsel %vm490, %v581, %v585
      %587 = vrot.lane.b32.xlu0 %v502, 4
      %v588 = vpop.permute.xlu0 %587
      %589 = vrot.lane.b32.xlu0 %v514, 4
      %v590 = vpop.permute.xlu0 %589
      %591 = vrot.lane.b32.xlu0 %v526, 4
      %v592 = vpop.permute.xlu0 %591
      %593 = vrot.lane.b32.xlu0 %v538, 4
      %v594 = vpop.permute.xlu0 %593
      %595 = vrot.lane.b32.xlu0 %v550, 4
      %v596 = vpop.permute.xlu0 %595
      %597 = vrot.lane.b32.xlu0 %v562, 4
      %v598 = vpop.permute.xlu0 %597
      %599 = vrot.lane.b32.xlu0 %v574, 4
      %v600 = vpop.permute.xlu0 %599
      %601 = vrot.lane.b32.xlu0 %v586, 4
      %v602 = vpop.permute.xlu0 %601
      %vm619 = vcmask 1046528
      %v620 = vrot.slane %v470, 1
      %v621 = vrot.slane %v471, 1
      %v622 = vsel %vm619, %v620, %v621
      %v623 = vrot.slane %v472, 1
      %v624 = vrot.slane %v473, 1
      %v625 = vsel %vm619, %v623, %v624
      %v626 = vrot.slane %v474, 1
      %v627 = vrot.slane %v475, 1
      %v628 = vsel %vm619, %v626, %v627
      %v629 = vrot.slane %v476, 1
      %v630 = vrot.slane %v477, 1
      %v631 = vsel %vm619, %v629, %v630
      %v632 = vrot.slane %v478, 1
      %v633 = vrot.slane %v479, 1
      %v634 = vsel %vm619, %v632, %v633
      %v635 = vrot.slane %v480, 1
      %v636 = vrot.slane %v481, 1
      %v637 = vsel %vm619, %v635, %v636
      %v638 = vrot.slane %v482, 1
      %v639 = vrot.slane %v483, 1
      %v640 = vsel %vm619, %v638, %v639
      %v641 = vrot.slane %v484, 1
      %v642 = vrot.slane %v485, 1
      %v643 = vsel %vm619, %v641, %v642
      %644 = vrot.lane.b32.xlu0 %v622, 8
      %v645 = vpop.permute.xlu0 %644
      %646 = vrot.lane.b32.xlu0 %v625, 8
      %v647 = vpop.permute.xlu0 %646
      %648 = vrot.lane.b32.xlu0 %v628, 8
      %v649 = vpop.permute.xlu0 %648
      %650 = vrot.lane.b32.xlu0 %v631, 8
      %v651 = vpop.permute.xlu0 %650
      %652 = vrot.lane.b32.xlu0 %v634, 8
      %v653 = vpop.permute.xlu0 %652
      %654 = vrot.lane.b32.xlu0 %v637, 8
      %v655 = vpop.permute.xlu0 %654
      %656 = vrot.lane.b32.xlu0 %v640, 8
      %v657 = vpop.permute.xlu0 %656
      %658 = vrot.lane.b32.xlu0 %v643, 8
      %v659 = vpop.permute.xlu0 %658
      %661 = vrot.lane.b32.xlu0 %v472, 12
      %v662 = vpop.permute.xlu0 %661
      %663 = vrot.lane.b32.xlu0 %v474, 12
      %v664 = vpop.permute.xlu0 %663
      %665 = vrot.lane.b32.xlu0 %v476, 12
      %v666 = vpop.permute.xlu0 %665
      %667 = vrot.lane.b32.xlu0 %v478, 12
      %v668 = vpop.permute.xlu0 %667
      %669 = vrot.lane.b32.xlu0 %v480, 12
      %v670 = vpop.permute.xlu0 %669
      %671 = vrot.lane.b32.xlu0 %v482, 12
      %v672 = vpop.permute.xlu0 %671
      %673 = vrot.lane.b32.xlu0 %v484, 12
      %v674 = vpop.permute.xlu0 %673
      %675 = vrot.lane.b32.xlu0 %v486, 12
      %v676 = vpop.permute.xlu0 %675
      %v678 = vshrl.u32 %v486, 16
      %v680 = vshll.u32 %v486, 16
      %v682 = vrot.slane %v680, 1
      %v683 = vor.u32 %v678, %v682
      %v685 = vshll.u32 %v487, 16
      %v687 = vrot.slane %v685, 1
      %v688 = vsel %vm490, %v683, %v687
      %689 = vrot.lane.b32.xlu0 %v514, 16
      %v690 = vpop.permute.xlu0 %689
      %691 = vrot.lane.b32.xlu0 %v526, 16
      %v692 = vpop.permute.xlu0 %691
      %693 = vrot.lane.b32.xlu0 %v538, 16
      %v694 = vpop.permute.xlu0 %693
      %695 = vrot.lane.b32.xlu0 %v550, 16
      %v696 = vpop.permute.xlu0 %695
      %697 = vrot.lane.b32.xlu0 %v562, 16
      %v698 = vpop.permute.xlu0 %697
      %699 = vrot.lane.b32.xlu0 %v574, 16
      %v700 = vpop.permute.xlu0 %699
      %701 = vrot.lane.b32.xlu0 %v586, 16
      %v702 = vpop.permute.xlu0 %701
      %703 = vrot.lane.b32.xlu0 %v688, 16
      %v704 = vpop.permute.xlu0 %703
      %v706 = vrot.slane %v486, 1
      %v707 = vrot.slane %v487, 1
      %v708 = vsel %vm619, %v706, %v707
      %709 = vrot.lane.b32.xlu0 %v625, 20
      %v710 = vpop.permute.xlu0 %709
      %711 = vrot.lane.b32.xlu0 %v628, 20
      %v712 = vpop.permute.xlu0 %711
      %713 = vrot.lane.b32.xlu0 %v631, 20
      %v714 = vpop.permute.xlu0 %713
      %715 = vrot.lane.b32.xlu0 %v634, 20
      %v716 = vpop.permute.xlu0 %715
      %717 = vrot.lane.b32.xlu0 %v637, 20
      %v718 = vpop.permute.xlu0 %717
      %719 = vrot.lane.b32.xlu0 %v640, 20
      %v720 = vpop.permute.xlu0 %719
      %721 = vrot.lane.b32.xlu0 %v643, 20
      %v722 = vpop.permute.xlu0 %721
      %723 = vrot.lane.b32.xlu0 %v708, 20
      %v724 = vpop.permute.xlu0 %723
      %726 = vrot.lane.b32.xlu0 %v474, 24
      %v727 = vpop.permute.xlu0 %726
      %728 = vrot.lane.b32.xlu0 %v476, 24
      %v729 = vpop.permute.xlu0 %728
      %730 = vrot.lane.b32.xlu0 %v478, 24
      %v731 = vpop.permute.xlu0 %730
      %732 = vrot.lane.b32.xlu0 %v480, 24
      %v733 = vpop.permute.xlu0 %732
      %734 = vrot.lane.b32.xlu0 %v482, 24
      %v735 = vpop.permute.xlu0 %734
      %736 = vrot.lane.b32.xlu0 %v484, 24
      %v737 = vpop.permute.xlu0 %736
      %738 = vrot.lane.b32.xlu0 %v486, 24
      %v739 = vpop.permute.xlu0 %738
      %740 = vrot.lane.b32.xlu0 %v488, 24
      %v741 = vpop.permute.xlu0 %740
      %v743 = vshrl.u32 %v488, 16
      %v745 = vshll.u32 %v488, 16
      %v747 = vrot.slane %v745, 1
      %v748 = vor.u32 %v743, %v747
      %v750 = vshll.u32 %v489, 16
      %v752 = vrot.slane %v750, 1
      %v753 = vsel %vm490, %v748, %v752
      %754 = vrot.lane.b32.xlu0 %v526, 28
      %v755 = vpop.permute.xlu0 %754
      %756 = vrot.lane.b32.xlu0 %v538, 28
      %v757 = vpop.permute.xlu0 %756
      %758 = vrot.lane.b32.xlu0 %v550, 28
      %v759 = vpop.permute.xlu0 %758
      %760 = vrot.lane.b32.xlu0 %v562, 28
      %v761 = vpop.permute.xlu0 %760
      %762 = vrot.lane.b32.xlu0 %v574, 28
      %v763 = vpop.permute.xlu0 %762
      %764 = vrot.lane.b32.xlu0 %v586, 28
      %v765 = vpop.permute.xlu0 %764
      %766 = vrot.lane.b32.xlu0 %v688, 28
      %v767 = vpop.permute.xlu0 %766
      %768 = vrot.lane.b32.xlu0 %v753, 28
      %v769 = vpop.permute.xlu0 %768
      %v771 = vrot.slane %v488, 1
      %v772 = vrot.slane %v489, 1
      %v773 = vsel %vm619, %v771, %v772
      %774 = vrot.lane.b32.xlu0 %v628, 32
      %v775 = vpop.permute.xlu0 %774
      %776 = vrot.lane.b32.xlu0 %v631, 32
      %v777 = vpop.permute.xlu0 %776
      %778 = vrot.lane.b32.xlu0 %v634, 32
      %v779 = vpop.permute.xlu0 %778
      %780 = vrot.lane.b32.xlu0 %v637, 32
      %v781 = vpop.permute.xlu0 %780
      %782 = vrot.lane.b32.xlu0 %v640, 32
      %v783 = vpop.permute.xlu0 %782
      %784 = vrot.lane.b32.xlu0 %v643, 32
      %v785 = vpop.permute.xlu0 %784
      %786 = vrot.lane.b32.xlu0 %v708, 32
      %v787 = vpop.permute.xlu0 %786
      %788 = vrot.lane.b32.xlu0 %v773, 32
      %v789 = vpop.permute.xlu0 %788
      %vm790 = vcmask 31744
      %v792 = vsel %vm790, %v470, %v588
      %v794 = vsel %vm790, %v472, %v590
      %v796 = vsel %vm790, %v474, %v592
      %v798 = vsel %vm790, %v476, %v594
      %v800 = vsel %vm790, %v478, %v596
      %v802 = vsel %vm790, %v480, %v598
      %v804 = vsel %vm790, %v482, %v600
      %v806 = vsel %vm790, %v484, %v602
      %vm807 = vcmask 64512
      %v809 = vsel %vm807, %v792, %v645
      %v811 = vsel %vm807, %v794, %v647
      %v813 = vsel %vm807, %v796, %v649
      %v815 = vsel %vm807, %v798, %v651
      %v817 = vsel %vm807, %v800, %v653
      %v819 = vsel %vm807, %v802, %v655
      %v821 = vsel %vm807, %v804, %v657
      %v823 = vsel %vm807, %v806, %v659
      %vm824 = vcmask 97280
      %v826 = vsel %vm824, %v809, %v662
      %v828 = vsel %vm824, %v811, %v664
      %v830 = vsel %vm824, %v813, %v666
      %v832 = vsel %vm824, %v815, %v668
      %v834 = vsel %vm824, %v817, %v670
      %v836 = vsel %vm824, %v819, %v672
      %v838 = vsel %vm824, %v821, %v674
      %v840 = vsel %vm824, %v823, %v676
      %vm841 = vcmask 130048
      %v843 = vsel %vm841, %v826, %v690
      %v845 = vsel %vm841, %v828, %v692
      %v847 = vsel %vm841, %v830, %v694
      %v849 = vsel %vm841, %v832, %v696
      %v851 = vsel %vm841, %v834, %v698
      %v853 = vsel %vm841, %v836, %v700
      %v855 = vsel %vm841, %v838, %v702
      %v857 = vsel %vm841, %v840, %v704
      %vm858 = vcmask 162816
      %v860 = vsel %vm858, %v843, %v710
      %v862 = vsel %vm858, %v845, %v712
      %v864 = vsel %vm858, %v847, %v714
      %v866 = vsel %vm858, %v849, %v716
      %v868 = vsel %vm858, %v851, %v718
      %v870 = vsel %vm858, %v853, %v720
      %v872 = vsel %vm858, %v855, %v722
      %v874 = vsel %vm858, %v857, %v724
      %vm875 = vcmask 195584
      %v877 = vsel %vm875, %v860, %v727
      %v879 = vsel %vm875, %v862, %v729
      %v881 = vsel %vm875, %v864, %v731
      %v883 = vsel %vm875, %v866, %v733
      %v885 = vsel %vm875, %v868, %v735
      %v887 = vsel %vm875, %v870, %v737
      %v889 = vsel %vm875, %v872, %v739
      %v891 = vsel %vm875, %v874, %v741
      %vm892 = vcmask 228352
      %v894 = vsel %vm892, %v877, %v755
      %v896 = vsel %vm892, %v879, %v757
      %v898 = vsel %vm892, %v881, %v759
      %v900 = vsel %vm892, %v883, %v761
      %v902 = vsel %vm892, %v885, %v763
      %v904 = vsel %vm892, %v887, %v765
      %v906 = vsel %vm892, %v889, %v767
      %v908 = vsel %vm892, %v891, %v769
      %vm909 = vcmask 261120
      %v911 = vsel %vm909, %v894, %v775
      %v913 = vsel %vm909, %v896, %v777
      %v915 = vsel %vm909, %v898, %v779
      %v917 = vsel %vm909, %v900, %v781
      %v919 = vsel %vm909, %v902, %v783
      %v921 = vsel %vm909, %v904, %v785
      %v923 = vsel %vm909, %v906, %v787
      %v925 = vsel %vm909, %v908, %v789
      %v926 = vld [vmem:[%s2] sm:$0xf]
      %v927 = vld [vmem:[%s2 + $0x4] sm:$0xf]
      %v928 = vld [vmem:[%s2 + $0x8] sm:$0xf]
      %v929 = vld [vmem:[%s2 + $0xc] sm:$0xf]
      %v930 = vld [vmem:[%s2 + $0x10] sm:$0x3]
      %v931 = vld [vmem:[%s3] sm:$0x1]
      %v933 = vlaneseq
      %v934 = vshrl.u32 %v933, 7
      %v935 = vsub.s32 0, %v934
      %v936 = vrot.slane %v931, %v935
      %v943 = vunpack.c.l.b16 %v926
      %v944 = vunpack.c.l.b16 %v927
      %v945 = vunpack.c.l.b16 %v928
      %v946 = vunpack.c.l.b16 %v929
      %v947 = vunpack.c.l.b16 %v930
      %v948 = vpack.c.b16 %v944, %v943
      %v949 = vpack.c.b16 %v946, %v945
      %v950 = vpack.c.b16 %v947, %v947
      %vm953 = vcmask 293888
      %v954 = vsel %vm953, %v911, 0
      %v956 = vsel %vm953, %v913, 0
      %v958 = vsel %vm953, %v915, 0
      %v960 = vsel %vm953, %v917, 0
      %v962 = vsel %vm953, %v919, 0
      %v964 = vsel %vm953, %v921, 0
      %v966 = vsel %vm953, %v923, 0
      %v968 = vsel %vm953, %v925, 0
      %vm970 = vcmask 1041408
      %v972 = vsel %vm970, %v950, 0
      %974 = vmatprep.subr.bf16.mxu0 0
      %975 = vmatpush1.bf16.msra.mxu0 %v948
      %976 = vmatprep.subr.bf16.mxu0 0
      %977 = vmatpush1.bf16.msra.mxu0 %v949
      %978 = vmatprep.subr.bf16.mxu0 0
      %979 = vmatpush1.bf16.msra.mxu0 %v972
      %980 = vmatprep.subr.bf16.mxu0 0
      %981 = vmatpush1.bf16.msra.mxu0 0
      %982 = vmatprep.subr.bf16.mxu0 0
      %983 = vmatpush1.bf16.msra.mxu0 0
      %984 = vmatprep.subr.bf16.mxu0 0
      %985 = vmatpush1.bf16.msra.mxu0 0
      %986 = vmatprep.subr.bf16.mxu0 0
      %987 = vmatpush1.bf16.msra.mxu0 0
      %988 = vmatprep.subr.bf16.mxu0 0
      %989 = vmatpush1.bf16.msra.mxu0 0
      %990 = vmatprep.subr.bf16.mxu0 0
      %991 = vmatpush1.bf16.msra.mxu0 0
      %992 = vmatprep.subr.bf16.mxu0 0
      %993 = vmatpush1.bf16.msra.mxu0 0
      %994 = vmatprep.subr.bf16.mxu0 0
      %995 = vmatpush1.bf16.msra.mxu0 0
      %996 = vmatprep.subr.bf16.mxu0 0
      %997 = vmatpush1.bf16.msra.mxu0 0
      %998 = vmatprep.subr.bf16.mxu0 0
      %999 = vmatpush1.bf16.msra.mxu0 0
      %1000 = vmatprep.subr.bf16.mxu0 0
      %1001 = vmatpush1.bf16.msra.mxu0 0
      %1002 = vmatprep.subr.bf16.mxu0 0
      %1003 = vmatpush1.bf16.msra.mxu0 0
      %1004 = vmatprep.subr.bf16.mxu0 0
      %1005 = vmatpush1.bf16.msra.mxu0 0
      %1006 = vmatprep.mubr.bf16.mxu0 0
      %1007 = vmatmul.mubr.bf16.gmra.mrb[0].mxu0 %v954
      %v1008 = vpop.f32.mrb[0].mxu0
      %v1009 = vadd.f32 %v936, %v1008
      %v1010 = vpop.f32.mrb[0].mxu0
      %v1011 = vpop.f32.mrb[0].mxu0
      %v1012 = vadd.f32 %v936, %v1011
      %v1013 = vpop.f32.mrb[0].mxu0
      %1014 = vmatprep.mubr.bf16.mxu0 0
      %1015 = vmatmul.mubr.bf16.gmra.mrb[0].mxu0 %v956
      %v1016 = vpop.f32.mrb[0].mxu0
      %v1017 = vadd.f32 %v936, %v1016
      %v1018 = vpop.f32.mrb[0].mxu0
      %v1019 = vpop.f32.mrb[0].mxu0
      %v1020 = vadd.f32 %v936, %v1019
      %v1021 = vpop.f32.mrb[0].mxu0
      %1022 = vmatprep.mubr.bf16.mxu0 0
      %1023 = vmatmul.mubr.bf16.gmra.mrb[0].mxu0 %v958
      %v1024 = vpop.f32.mrb[0].mxu0
      %v1025 = vadd.f32 %v936, %v1024
      %v1026 = vpop.f32.mrb[0].mxu0
      %v1027 = vpop.f32.mrb[0].mxu0
      %v1028 = vadd.f32 %v936, %v1027
      %v1029 = vpop.f32.mrb[0].mxu0
      %1030 = vmatprep.mubr.bf16.mxu0 0
      %1031 = vmatmul.mubr.bf16.gmra.mrb[0].mxu0 %v960
      %v1032 = vpop.f32.mrb[0].mxu0
      %v1033 = vadd.f32 %v936, %v1032
      %v1034 = vpop.f32.mrb[0].mxu0
      %v1035 = vpop.f32.mrb[0].mxu0
      %v1036 = vadd.f32 %v936, %v1035
      %v1037 = vpop.f32.mrb[0].mxu0
      %1038 = vmatprep.mubr.bf16.mxu0 0
      %1039 = vmatmul.mubr.bf16.gmra.mrb[0].mxu0 %v962
      %v1040 = vpop.f32.mrb[0].mxu0
      %v1041 = vadd.f32 %v936, %v1040
      %v1042 = vpop.f32.mrb[0].mxu0
      %v1043 = vpop.f32.mrb[0].mxu0
      %v1044 = vadd.f32 %v936, %v1043
      %v1045 = vpop.f32.mrb[0].mxu0
      %1046 = vmatprep.mubr.bf16.mxu0 0
      %1047 = vmatmul.mubr.bf16.gmra.mrb[0].mxu0 %v964
      %v1048 = vpop.f32.mrb[0].mxu0
      %v1049 = vadd.f32 %v936, %v1048
      %v1050 = vpop.f32.mrb[0].mxu0
      %v1051 = vpop.f32.mrb[0].mxu0
      %v1052 = vadd.f32 %v936, %v1051
      %v1053 = vpop.f32.mrb[0].mxu0
      %1054 = vmatprep.mubr.bf16.mxu0 0
      %1055 = vmatmul.mubr.bf16.gmra.mrb[0].mxu0 %v966
      %v1056 = vpop.f32.mrb[0].mxu0
      %v1057 = vadd.f32 %v936, %v1056
      %v1058 = vpop.f32.mrb[0].mxu0
      %v1059 = vpop.f32.mrb[0].mxu0
      %v1060 = vadd.f32 %v936, %v1059
      %v1061 = vpop.f32.mrb[0].mxu0
      %1062 = vmatprep.mubr.bf16.mxu0 0
      %1063 = vmatmul.mubr.bf16.gmra.mrb[0].mxu0 %v968
      %v1064 = vpop.f32.mrb[0].mxu0
      %v1065 = vadd.f32 %v936, %v1064
      %v1066 = vpop.f32.mrb[0].mxu0
      %v1067 = vpop.f32.mrb[0].mxu0
      %v1068 = vadd.f32 %v936, %v1067
      %v1069 = vpop.f32.mrb[0].mxu0
      %1070 = vdwg.mxu0
      %1071 = vst.msk [vmem:[%s289] sm:$0xff] %vm790, %v1009
      %1072 = vst.msk [vmem:[%s289 + $0x8] sm:$0xff] %vm790, %v1012
      %1073 = vst.msk [vmem:[%s289 + $0x10] sm:$0xff] %vm790, %v1017
      %1074 = vst.msk [vmem:[%s289 + $0x18] sm:$0xff] %vm790, %v1020
      %1075 = vst.msk [vmem:[%s289 + $0x20] sm:$0xff] %vm790, %v1025
      %1076 = vst.msk [vmem:[%s289 + $0x28] sm:$0xff] %vm790, %v1028
      %1077 = vst.msk [vmem:[%s289 + $0x30] sm:$0xff] %vm790, %v1033
      %1078 = vst.msk [vmem:[%s289 + $0x38] sm:$0xff] %vm790, %v1036
      %1079 = vst.msk [vmem:[%s289 + $0x40] sm:$0xff] %vm790, %v1041
      %1080 = vst.msk [vmem:[%s289 + $0x48] sm:$0xff] %vm790, %v1044
      %1081 = vst.msk [vmem:[%s289 + $0x50] sm:$0xff] %vm790, %v1049
      %1082 = vst.msk [vmem:[%s289 + $0x58] sm:$0xff] %vm790, %v1052
      %1083 = vst.msk [vmem:[%s289 + $0x60] sm:$0xff] %vm790, %v1057
      %1084 = vst.msk [vmem:[%s289 + $0x68] sm:$0xff] %vm790, %v1060
      %1085 = vst.msk [vmem:[%s289 + $0x70] sm:$0xff] %vm790, %v1065
      %1086 = vst.msk [vmem:[%s289 + $0x78] sm:$0xff] %vm790, %v1068
      %s1087 = smul.u32 8, %s22
      %p1088 = scmp.lt.s32.totalorder %s21, 1
      %s1089 = scalar_select %p1088, %s21, 1
      %p1090 = scmp.lt.s32.totalorder %s1087, 15
      %s1091 = scalar_select %p1090, %s1087, 15
      %s1092 = smul.addr %s1091, 2
      %s1093 = smul.addr %s1089, 32
      %s1094 = sadd.s32 %s1092, %s1093
      %s1095 = smul.addr %s1094, 8
      %s1096 = scalar_lea.vmem %s6, %s1095
      // Predicated region
      $region45: #{ao_forward.4} parent=43 // pred_check
        %p1097 = pneg %p182
      $region46: #{ao_forward.4} parent=43 // pred_check_branch
        %1099 = sbr.rel (%p1097) target = $region48
      $region47: #{ao_forward.4} parent=43 // pred_region
        %s1100 = smul.u32 8, %s22
      $region48: #{ao_forward.4} parent=43 // pred_fallthru
        _
    $region44: #{ao_forward.4} parent=5 // pred_fallthru
      _
    %p1101 = scmp.le.s32.totalorder 2, %s12
    // Predicated region
    $region49: #{ao_forward.4} parent=5 // pred_check
      %p1102 = pneg %p1101
    $region50: #{ao_forward.4} parent=5 // pred_check_branch
      %1104 = sbr.rel (%p1102) target = $region52
    $region51: #{ao_forward.4} parent=5 // pred_region
      %s1105 = ssub.s32 %s12, 2
      // Predicated region
      $region53: #{ao_forward.4} parent=51 // pred_check
        %p1106 = pneg %p188
      $region54: #{ao_forward.4} parent=51 // pred_check_branch
        %1108 = sbr.rel (%p1106) target = $region56
      $region55: #{ao_forward.4} parent=51 // pred_region
        %s1109 = smul.u32 8, %s24
        %p1110 = scmp.lt.s32.totalorder %s23, 1
        %s1111 = scalar_select %p1110, %s23, 1
        %p1112 = scmp.lt.s32.totalorder %s1109, 15
        %s1113 = scalar_select %p1112, %s1109, 15
        %s1114 = smul.addr %s1113, 2
        %s1115 = smul.addr %s1111, 32
        %s1116 = sadd.s32 %s1114, %s1115
        %s1117 = smul.addr %s1116, 8
        %s1118 = scalar_lea.vmem %s6, %s1117
      $region56: #{ao_forward.4} parent=51 // pred_fallthru
        _
    $region52: #{ao_forward.4} parent=5 // pred_fallthru
      _
  $region6: #{ao_forward.4} parent=0 // loop_footer
    %s16 = sadd.s32 1, %s12
  $region7: #{ao_forward.4} parent=0 // loop_footer_branch
    %11 = sbr.rel target = $region3
  $region8: #{ao_forward.4} parent=0 // loop_exit
    _

// kernel: ao_forward.5
$region0: #{ao_forward.5}
  #allocation0 [shape = 'u32[]', space=smem, size = 0x4, offset = 0x4, fixed_abs, tag = 'smem constant byte address 0x4 - core index']
  #allocation1 [shape = 'u32[144,128]{1,0:T(1,128)}', space=vmem, size = 0x12000, scoped, tag = 'internal scratch']
  %s0 = inlined_call_operand.vmem [shape: f32[2,4,16,16], index: 0, kind: input, shape index: {}]
  %s1 = inlined_call_operand.vmem [shape: f32[32,16], index: 1, kind: input, shape index: {}]
  %s2 = inlined_call_operand.vmem [shape: f32[16,32], index: 2, kind: input, shape index: {}]
  %s3 = inlined_call_operand.hbm [shape: f32[2,4,32,32], index: 3, kind: output, shape index: {}]
  %s4 = sld [smem:[#allocation0]]
  $region45: #{ao_forward.5} parent=0
    _
  %s6 = ssub.s32 1, %s4
  %s7 = scalar_select 0, %s6, %s4
  $region1: #{ao_forward.5} parent=0
    #allocation2 [shape = 'u8[32768]{0}', space=vmem, size = 0x8000, scoped, tag = 'output window, operand 0']
    #allocation3 [shape = 's32[2]{0}', space=sflag, size = 0x8, scoped, tag = 'scoped memory for ao_forward.5']
    %8 = vsyncpa [#allocation3], 0
    %s9 = scalar_lea.sflag [#allocation3], 1
    %10 = vsyncpa %s9, 0
    loop: start=0, step=1, limit=10
    $region2: #{ao_forward.5} parent=1 // loop_pre_header
      _
    $region3: #{ao_forward.5} parent=1 // loop_header
      %s12 = sphi 0, %s16
      %p13 = scmp.ge.s32.totalorder %s12, 10
      %s19 = sphi 0, %s31
      %s20 = sphi 0, %s27
      %s21 = sphi 0, %s19
      %s22 = sphi 0, %s20
      %s23 = sphi 0, %s21
      %s24 = sphi 0, %s22
      %s36 = sphi 0, %s38
      %s39 = sphi 0, %s36
      %s40 = sphi 0, %s39
      %s56 = sphi 0, %s40
      %s60 = sphi 0, %s60
      %s62 = sphi 0, %s60
      %s63 = sphi 0, %s62
      %s77 = sphi 0, %s63
      %s81 = sphi 0, %s81
      %s83 = sphi 0, %s81
      %s84 = sphi 0, %s83
      %s98 = sphi 0, %s84
      %s106 = sphi 0, %s108
      %s109 = sphi 0, %s106
      %s110 = sphi 0, %s109
      %s126 = sphi 0, %s110
    $region4: #{ao_forward.5} parent=1 // loop_header_branch
      %15 = sbr.rel (%p13) target = $region8
    $region5: #{ao_forward.5} parent=1 // loop_body
      %s17 = ssub.s32 %s12, 1
      %s18 = ssub.s32 %s12, 2
      %s25 = sadd.s32 1, %s20
      %p26 = scmp.ge.s32.totalorder %s25, 4
      %s27 = scalar_select %p26, 0, %s25
      %s28 = sadd.s32 1, %s19
      %s29 = scalar_select %p26, %s28, %s19
      %p30 = scmp.ge.s32.totalorder %s29, 2
      %s31 = scalar_select %p30, 0, %s29
      %s32 = ssub.s32 %s19, %s31
      %s33 = ssub.s32 %s20, %s27
      %s34 = sor.u32 %s32, %s33
      %p35 = scmp.eq.s32.totalorder %s34, 0
      %s37 = sadd.s32 %s36, 1
      %s38 = scalar_select %p35, %s36, %s37
      %p41 = pneg %p35
      %p42 = scmp.eq.s32.totalorder %s12, 7
      %p43 = por %p41, %p42
      %p44 = scmp.ne.s32.totalorder %s36, %s39
      %p45 = scmp.eq.s32.totalorder %s12, 0
      %p46 = por %p44, %p45
      %p47 = scmp.ne.s32.totalorder %s36, %s39
      %p48 = scmp.eq.s32.totalorder %s17, 7
      %p49 = por %p47, %p48
      %p50 = scmp.ne.s32.totalorder %s39, %s40
      %p51 = scmp.eq.s32.totalorder %s17, 0
      %p52 = por %p50, %p51
      %p53 = scmp.ne.s32.totalorder %s39, %s40
      %p54 = scmp.eq.s32.totalorder %s18, 7
      %p55 = por %p53, %p54
      %p57 = scmp.ne.s32.totalorder %s40, %s56
      %p58 = scmp.eq.s32.totalorder %s18, 0
      %p59 = por %p57, %p58
      %s61 = sadd.s32 %s60, 1
      %p64 = scmp.eq.s32.totalorder %s12, 7
      %p65 = scmp.ne.s32.totalorder %s60, %s62
      %p66 = scmp.eq.s32.totalorder %s12, 0
      %p67 = por %p65, %p66
      %p68 = scmp.ne.s32.totalorder %s60, %s62
      %p69 = scmp.eq.s32.totalorder %s17, 7
      %p70 = por %p68, %p69
      %p71 = scmp.ne.s32.totalorder %s62, %s63
      %p72 = scmp.eq.s32.totalorder %s17, 0
      %p73 = por %p71, %p72
      %p74 = scmp.ne.s32.totalorder %s62, %s63
      %p75 = scmp.eq.s32.totalorder %s18, 7
      %p76 = por %p74, %p75
      %p78 = scmp.ne.s32.totalorder %s63, %s77
      %p79 = scmp.eq.s32.totalorder %s18, 0
      %p80 = por %p78, %p79
      %s82 = sadd.s32 %s81, 1
      %p85 = scmp.eq.s32.totalorder %s12, 7
      %p86 = scmp.ne.s32.totalorder %s81, %s83
      %p87 = scmp.eq.s32.totalorder %s12, 0
      %p88 = por %p86, %p87
      %p89 = scmp.ne.s32.totalorder %s81, %s83
      %p90 = scmp.eq.s32.totalorder %s17, 7
      %p91 = por %p89, %p90
      %p92 = scmp.ne.s32.totalorder %s83, %s84
      %p93 = scmp.eq.s32.totalorder %s17, 0
      %p94 = por %p92, %p93
      %p95 = scmp.ne.s32.totalorder %s83, %s84
      %p96 = scmp.eq.s32.totalorder %s18, 7
      %p97 = por %p95, %p96
      %p99 = scmp.ne.s32.totalorder %s84, %s98
      %p100 = scmp.eq.s32.totalorder %s18, 0
      %p101 = por %p99, %p100
      %s102 = ssub.s32 %s19, %s31
      %s103 = ssub.s32 %s20, %s27
      %s104 = sor.u32 %s102, %s103
      %p105 = scmp.eq.s32.totalorder %s104, 0
      %s107 = sadd.s32 %s106, 1
      %s108 = scalar_select %p105, %s106, %s107
      %p111 = pneg %p105
      %p112 = scmp.eq.s32.totalorder %s12, 7
      %p113 = por %p111, %p112
      %p114 = scmp.ne.s32.totalorder %s106, %s109
      %p115 = scmp.eq.s32.totalorder %s12, 0
      %p116 = por %p114, %p115
      %p117 = scmp.ne.s32.totalorder %s106, %s109
      %p118 = scmp.eq.s32.totalorder %s17, 7
      %p119 = por %p117, %p118
      %p120 = scmp.ne.s32.totalorder %s109, %s110
      %p121 = scmp.eq.s32.totalorder %s17, 0
      %p122 = por %p120, %p121
      %p123 = scmp.ne.s32.totalorder %s109, %s110
      %p124 = scmp.eq.s32.totalorder %s18, 7
      %p125 = por %p123, %p124
      %p127 = scmp.ne.s32.totalorder %s110, %s126
      %p128 = scmp.eq.s32.totalorder %s18, 0
      %p129 = por %p127, %p128
      %p130 = scmp.le.s32.totalorder 1, %s12
      %p131 = scmp.lt.s32.totalorder %s12, 9
      %p132 = pnand %p130, %p131
      %p133 = pneg %p132
      // Predicated region
      $region9: #{ao_forward.5} parent=5 // pred_check
        _
      $region10: #{ao_forward.5} parent=5 // pred_check_branch
        %135 = sbr.rel (%p132) target = $region12
      $region11: #{ao_forward.5} parent=5 // pred_region
        %s136 = ssub.s32 %s12, 1
        // Predicated region
        $region13: #{ao_forward.5} parent=11 // pred_check
          %p137 = pneg %p73
        $region14: #{ao_forward.5} parent=11 // pred_check_branch
          %139 = sbr.rel (%p137) target = $region16
        $region15: #{ao_forward.5} parent=11 // pred_region
          _
        $region16: #{ao_forward.5} parent=11 // pred_fallthru
          _
        // Predicated region
        $region17: #{ao_forward.5} parent=11 // pred_check
          %p140 = pneg %p94
        $region18: #{ao_forward.5} parent=11 // pred_check_branch
          %142 = sbr.rel (%p140) target = $region20
        $region19: #{ao_forward.5} parent=11 // pred_region
          _
        $region20: #{ao_forward.5} parent=11 // pred_fallthru
          _
      $region12: #{ao_forward.5} parent=5 // pred_fallthru
        _
      %p143 = scmp.lt.s32.totalorder %s12, 8
      // Predicated region
      $region21: #{ao_forward.5} parent=5 // pred_check
        %p144 = pneg %p143
      $region22: #{ao_forward.5} parent=5 // pred_check_branch
        %146 = sbr.rel (%p144) target = $region24
      $region23: #{ao_forward.5} parent=5 // pred_region
        // Predicated region
        $region25: #{ao_forward.5} parent=23 // pred_check
          %p147 = pneg %p46
        $region26: #{ao_forward.5} parent=23 // pred_check_branch
          %149 = sbr.rel (%p147) target = $region28
        $region27: #{ao_forward.5} parent=23 // pred_region
          %p150 = scmp.lt.s32.totalorder %s19, 1
          %s151 = scalar_select %p150, %s19, 1
          %p152 = scmp.lt.s32.totalorder %s20, 3
          %s153 = scalar_select %p152, %s20, 3
          %s154 = smul.addr %s153, 2
          %s155 = smul.addr %s151, 8
          %s156 = sadd.s32 %s154, %s155
          %s157 = smul.addr %s156, 8
          %s158 = scalar_lea.vmem %s0, %s157
        $region28: #{ao_forward.5} parent=23 // pred_fallthru
          _
      $region24: #{ao_forward.5} parent=5 // pred_fallthru
        _
      %p159 = scmp.le.s32.totalorder 1, %s12
      %p160 = scmp.lt.s32.totalorder %s12, 9
      %p161 = pnand %p159, %p160
      %p162 = pneg %p161
      // Predicated region
      $region29: #{ao_forward.5} parent=5 // pred_check
        _
      $region30: #{ao_forward.5} parent=5 // pred_check_branch
        %164 = sbr.rel (%p161) target = $region32
      $region31: #{ao_forward.5} parent=5 // pred_region
        %s165 = ssub.s32 %s12, 1
        %p166 = scmp.lt.s32.totalorder %s21, 1
        %s167 = scalar_select %p166, %s21, 1
        %p168 = scmp.lt.s32.totalorder %s22, 3
        %s169 = scalar_select %p168, %s22, 3
        %s170 = smul.addr %s169, 2
        %s171 = smul.addr %s167, 8
        %s172 = sadd.s32 %s170, %s171
        %s173 = smul.addr %s172, 8
        %s174 = scalar_lea.vmem %s0, %s173
        %p175 = pneg %p52
        %p176 = pneg %p49
        %p177 = pneg %p73
        %p178 = pneg %p70
        %p179 = pneg %p94
        %p180 = pneg %p91
        %p181 = pneg %p122
        %p182 = pneg %p119
        %s183 = sand.u32 %s109, 1
        %s184 = scalar_lea.sflag [#allocation3], %s183
        %s185 = sand.u32 %s109, 1
        %s186 = smul.addr %s185, 32
        %s187 = scalar_lea.vmem [#allocation2], %s186
        %p188 = scmp.lt.s32.totalorder %s21, 1
        %s189 = scalar_select %p188, %s21, 1
        %p190 = scmp.lt.s32.totalorder %s22, 3
        %s191 = scalar_select %p190, %s22, 3
        %s192 = smul.addr %s191, 2
        %s193 = smul.addr %s189, 8
        %s194 = sadd.s32 %s192, %s193
        %s195 = smul.addr %s194, 8
        %s196 = scalar_lea.vmem %s0, %s195
        %v197 = vld [vmem:[%s1] sm:$0xff]
        %v198 = vld [vmem:[%s1 + $0x8] sm:$0xff]
        %v199 = vld [vmem:[%s1 + $0x10] sm:$0xff]
        %v200 = vld [vmem:[%s1 + $0x18] sm:$0xff]
        %v201 = vld [vmem:[%s196] sm:$0xff]
        %v202 = vld [vmem:[%s196 + $0x8] sm:$0xff]
        %vm203 = vcmask 130048
        %v205 = vsel %vm203, %v197, 0
        %v208 = vsel %vm203, %v198, 0
        %v211 = vsel %vm203, %v199, 0
        %v214 = vsel %vm203, %v200, 0
        %216 = vmatprep.subr.mxu0 0.0
        %217 = vmatpush1.msra.mxu0 %v201
        %218 = vmatprep.subr.mxu0 0.0
        %219 = vmatpush1.msra.mxu0 %v202
        %220 = vmatprep.subr.mxu0 0.0
        %221 = vmatpush1.msra.mxu0 0.0
        %222 = vmatprep.subr.mxu0 0.0
        %223 = vmatpush1.msra.mxu0 0.0
        %224 = vmatprep.subr.mxu0 0.0
        %225 = vmatpush1.msra.mxu0 0.0
        %226 = vmatprep.subr.mxu0 0.0
        %227 = vmatpush1.msra.mxu0 0.0
        %228 = vmatprep.subr.mxu0 0.0
        %229 = vmatpush1.msra.mxu0 0.0
        %230 = vmatprep.subr.mxu0 0.0
        %231 = vmatpush1.msra.mxu0 0.0
        %232 = vmatprep.subr.mxu0 0.0
        %233 = vmatpush1.msra.mxu0 0.0
        %234 = vmatprep.subr.mxu0 0.0
        %235 = vmatpush1.msra.mxu0 0.0
        %236 = vmatprep.subr.mxu0 0.0
        %237 = vmatpush1.msra.mxu0 0.0
        %238 = vmatprep.subr.mxu0 0.0
        %239 = vmatpush1.msra.mxu0 0.0
        %240 = vmatprep.subr.mxu0 0.0
        %241 = vmatpush1.msra.mxu0 0.0
        %242 = vmatprep.subr.mxu0 0.0
        %243 = vmatpush1.msra.mxu0 0.0
        %244 = vmatprep.subr.mxu0 0.0
        %245 = vmatpush1.msra.mxu0 0.0
        %246 = vmatprep.subr.mxu0 0.0
        %247 = vmatpush1.msra.mxu0 0.0
        %248 = vmatprep.subr.mxu0 0.0
        %249 = vmatpush1.msra.mxu0 0.0
        %250 = vmatprep.subr.mxu0 0.0
        %251 = vmatpush1.msra.mxu0 0.0
        %252 = vmatprep.subr.mxu0 0.0
        %253 = vmatpush1.msra.mxu0 0.0
        %254 = vmatprep.subr.mxu0 0.0
        %255 = vmatpush1.msra.mxu0 0.0
        %256 = vmatprep.subr.mxu0 0.0
        %257 = vmatpush1.msra.mxu0 0.0
        %258 = vmatprep.subr.mxu0 0.0
        %259 = vmatpush1.msra.mxu0 0.0
        %260 = vmatprep.subr.mxu0 0.0
        %261 = vmatpush1.msra.mxu0 0.0
        %262 = vmatprep.subr.mxu0 0.0
        %263 = vmatpush1.msra.mxu0 0.0
        %264 = vmatprep.subr.mxu0 0.0
        %265 = vmatpush1.msra.mxu0 0.0
        %266 = vmatprep.subr.mxu0 0.0
        %267 = vmatpush1.msra.mxu0 0.0
        %268 = vmatprep.subr.mxu0 0.0
        %269 = vmatpush1.msra.mxu0 0.0
        %270 = vmatprep.subr.mxu0 0.0
        %271 = vmatpush1.msra.mxu0 0.0
        %272 = vmatprep.subr.mxu0 0.0
        %273 = vmatpush1.msra.mxu0 0.0
        %274 = vmatprep.subr.mxu0 0.0
        %275 = vmatpush1.msra.mxu0 0.0
        %276 = vmatprep.subr.mxu0 0.0
        %277 = vmatpush1.msra.mxu0 0.0
        %278 = vmatprep.subr.mxu0 0.0
        %279 = vmatpush1.msra.mxu0 0.0
        %280 = vmatprep.mubr.f32.mxu0 0.0
        %281 = vmatmul.mubr.f32.gmra.mrb[0].mxu0 %v205
        %v282 = vpop.f32.mrb[0].mxu0
        %v283 = vadd.f32 0.0, %v282
        %v284 = vpop.f32.mrb[0].mxu0
        %285 = vmatprep.mubr.f32.mxu0 0.0
        %286 = vmatmul.mubr.f32.gmra.mrb[0].mxu0 %v208
        %v287 = vpop.f32.mrb[0].mxu0
        %v288 = vadd.f32 0.0, %v287
        %v289 = vpop.f32.mrb[0].mxu0
        %290 = vmatprep.mubr.f32.mxu0 0.0
        %291 = vmatmul.mubr.f32.gmra.mrb[0].mxu0 %v211
        %v292 = vpop.f32.mrb[0].mxu0
        %v293 = vadd.f32 0.0, %v292
        %v294 = vpop.f32.mrb[0].mxu0
        %295 = vmatprep.mubr.f32.mxu0 0.0
        %296 = vmatmul.mubr.f32.gmra.mrb[0].mxu0 %v214
        %v297 = vpop.f32.mrb[0].mxu0
        %v298 = vadd.f32 0.0, %v297
        %v299 = vpop.f32.mrb[0].mxu0
        %300 = vdwg.mxu0
        %v301 = vld [vmem:[%s2] sm:$0xff]
        %v302 = vld [vmem:[%s2 + $0x8] sm:$0xff]
        %v304 = vsel %vm203, %v283, 0
        %v307 = vsel %vm203, %v288, 0
        %v310 = vsel %vm203, %v293, 0
        %v313 = vsel %vm203, %v298, 0
        %315 = vmatprep.subr.mxu0 0.0
        %316 = vmatpush1.msra.mxu0 %v301
        %317 = vmatprep.subr.mxu0 0.0
        %318 = vmatpush1.msra.mxu0 %v302
        %319 = vmatprep.subr.mxu0 0.0
        %320 = vmatpush1.msra.mxu0 0.0
        %321 = vmatprep.subr.mxu0 0.0
        %322 = vmatpush1.msra.mxu0 0.0
        %323 = vmatprep.subr.mxu0 0.0
        %324 = vmatpush1.msra.mxu0 0.0
        %325 = vmatprep.subr.mxu0 0.0
        %326 = vmatpush1.msra.mxu0 0.0
        %327 = vmatprep.subr.mxu0 0.0
        %328 = vmatpush1.msra.mxu0 0.0
        %329 = vmatprep.subr.mxu0 0.0
        %330 = vmatpush1.msra.mxu0 0.0
        %331 = vmatprep.subr.mxu0 0.0
        %332 = vmatpush1.msra.mxu0 0.0
        %333 = vmatprep.subr.mxu0 0.0
        %334 = vmatpush1.msra.mxu0 0.0
        %335 = vmatprep.subr.mxu0 0.0
        %336 = vmatpush1.msra.mxu0 0.0
        %337 = vmatprep.subr.mxu0 0.0
        %338 = vmatpush1.msra.mxu0 0.0
        %339 = vmatprep.subr.mxu0 0.0
        %340 = vmatpush1.msra.mxu0 0.0
        %341 = vmatprep.subr.mxu0 0.0
        %342 = vmatpush1.msra.mxu0 0.0
        %343 = vmatprep.subr.mxu0 0.0
        %344 = vmatpush1.msra.mxu0 0.0
        %345 = vmatprep.subr.mxu0 0.0
        %346 = vmatpush1.msra.mxu0 0.0
        %347 = vmatprep.subr.mxu0 0.0
        %348 = vmatpush1.msra.mxu0 0.0
        %349 = vmatprep.subr.mxu0 0.0
        %350 = vmatpush1.msra.mxu0 0.0
        %351 = vmatprep.subr.mxu0 0.0
        %352 = vmatpush1.msra.mxu0 0.0
        %353 = vmatprep.subr.mxu0 0.0
        %354 = vmatpush1.msra.mxu0 0.0
        %355 = vmatprep.subr.mxu0 0.0
        %356 = vmatpush1.msra.mxu0 0.0
        %357 = vmatprep.subr.mxu0 0.0
        %358 = vmatpush1.msra.mxu0 0.0
        %359 = vmatprep.subr.mxu0 0.0
        %360 = vmatpush1.msra.mxu0 0.0
        %361 = vmatprep.subr.mxu0 0.0
        %362 = vmatpush1.msra.mxu0 0.0
        %363 = vmatprep.subr.mxu0 0.0
        %364 = vmatpush1.msra.mxu0 0.0
        %365 = vmatprep.subr.mxu0 0.0
        %366 = vmatpush1.msra.mxu0 0.0
        %367 = vmatprep.subr.mxu0 0.0
        %368 = vmatpush1.msra.mxu0 0.0
        %369 = vmatprep.subr.mxu0 0.0
        %370 = vmatpush1.msra.mxu0 0.0
        %371 = vmatprep.subr.mxu0 0.0
        %372 = vmatpush1.msra.mxu0 0.0
        %373 = vmatprep.subr.mxu0 0.0
        %374 = vmatpush1.msra.mxu0 0.0
        %375 = vmatprep.subr.mxu0 0.0
        %376 = vmatpush1.msra.mxu0 0.0
        %377 = vmatprep.subr.mxu0 0.0
        %378 = vmatpush1.msra.mxu0 0.0
        %379 = vmatprep.mubr.f32.mxu0 0.0
        %380 = vmatmul.mubr.f32.gmra.mrb[0].mxu0 %v304
        %v381 = vpop.f32.mrb[0].mxu0
        %v382 = vadd.f32 0.0, %v381
        %v383 = vpop.f32.mrb[0].mxu0
        %384 = vmatprep.mubr.f32.mxu0 0.0
        %385 = vmatmul.mubr.f32.gmra.mrb[0].mxu0 %v307
        %v386 = vpop.f32.mrb[0].mxu0
        %v387 = vadd.f32 0.0, %v386
        %v388 = vpop.f32.mrb[0].mxu0
        %389 = vmatprep.mubr.f32.mxu0 0.0
        %390 = vmatmul.mubr.f32.gmra.mrb[0].mxu0 %v310
        %v391 = vpop.f32.mrb[0].mxu0
        %v392 = vadd.f32 0.0, %v391
        %v393 = vpop.f32.mrb[0].mxu0
        %394 = vmatprep.mubr.f32.mxu0 0.0
        %395 = vmatmul.mubr.f32.gmra.mrb[0].mxu0 %v313
        %v396 = vpop.f32.mrb[0].mxu0
        %v397 = vadd.f32 0.0, %v396
        %v398 = vpop.f32.mrb[0].mxu0
        %399 = vdwg.mxu0
        %vm400 = vcmask 261120
        %401 = vst.msk [vmem:[%s187] sm:$0xff] %vm400, %v382
        %402 = vst.msk [vmem:[%s187 + $0x8] sm:$0xff] %vm400, %v387
        %403 = vst.msk [vmem:[%s187 + $0x10] sm:$0xff] %vm400, %v392
        %404 = vst.msk [vmem:[%s187 + $0x18] sm:$0xff] %vm400, %v397
        %s405 = sand.u32 %s109, 1
        %s406 = scalar_lea.sflag [#allocation3], %s405
        %s407 = sand.u32 %s109, 1
        %s408 = smul.addr %s407, 32
        %s409 = scalar_lea.vmem [#allocation2], %s408
        // Predicated region
        $region33: #{ao_forward.5} parent=31 // pred_check
          %p410 = pneg %p119
        $region34: #{ao_forward.5} parent=31 // pred_check_branch
          %412 = sbr.rel (%p410) target = $region36
        $region35: #{ao_forward.5} parent=31 // pred_region
          %s414 = ssub.s32 512, 512
          %415 = vsyncadd %s406, %s414
          %s416 = smul.addr %s22, 4
          %s417 = smul.addr %s21, 16
          %s418 = sadd.s32 %s416, %s417
          %s419 = smul.addr %s418, 128
          %s420 = scalar_lea.hbm %s3, %s419
          %s421 = sshll.u32 %s409, 4
          %s422 = int_to_ptr.vmem [resolvable:$true] %s421
          %427 = dma.vmem_to_hbm [thread:$0]  %s422, 512, %s420, %s406, 128, 128, 8
        $region36: #{ao_forward.5} parent=31 // pred_fallthru
          _
      $region32: #{ao_forward.5} parent=5 // pred_fallthru
        _
      %p428 = scmp.le.s32.totalorder 2, %s12
      // Predicated region
      $region37: #{ao_forward.5} parent=5 // pred_check
        %p429 = pneg %p428
      $region38: #{ao_forward.5} parent=5 // pred_check_branch
        %431 = sbr.rel (%p429) target = $region40
      $region39: #{ao_forward.5} parent=5 // pred_region
        %s432 = ssub.s32 %s12, 2
        // Predicated region
        $region41: #{ao_forward.5} parent=39 // pred_check
          %p433 = pneg %p125
        $region42: #{ao_forward.5} parent=39 // pred_check_branch
          %435 = sbr.rel (%p433) target = $region44
        $region43: #{ao_forward.5} parent=39 // pred_region
          %s436 = sand.u32 %s110, 1
          %s437 = scalar_lea.sflag [#allocation3], %s436
          %s438 = sand.u32 %s110, 1
          %s439 = smul.addr %s438, 32
          %s440 = scalar_lea.vmem [#allocation2], %s439
          %441 = dma.done %s437, 512
        $region44: #{ao_forward.5} parent=39 // pred_fallthru
          _
      $region40: #{ao_forward.5} parent=5 // pred_fallthru
        _
    $region6: #{ao_forward.5} parent=1 // loop_footer
      %s16 = sadd.s32 1, %s12
    $region7: #{ao_forward.5} parent=1 // loop_footer_branch
      %11 = sbr.rel target = $region3
    $region8: #{ao_forward.5} parent=1 // loop_exit
      _
    %442 = vsyncpa [#allocation3], 1
    %s443 = scalar_lea.sflag [#allocation3], 1
    %444 = vsyncpa %s443, 1

</llo_original>
